<compile_context>
chip_gen: v7x
topology: tpu7x:2x2x1
jax: 0.10.0
libtpu: 0.0.40
codegen_flags: <defaults>
</compile_context>

<pallas_src>
import math
import functools

import numpy as np
import jax
import jax.numpy as jnp
from jax.experimental import pallas as pl
from jax.experimental.pallas import tpu as pltpu

_VMEM_LIMIT = 32 * 1024 * 1024   # >= default scoped limit on all of v5e/v6e/v7x


# ----------------------------------------------------------------------------
# Pallas kernels
# ----------------------------------------------------------------------------

def _point_sample_kernel(img_ids_ref, rowidx_ref, colidx_ref, pts_ref, fmap_ref,
                         out_ref, *, H, W):
    """Bilinear grid_sample(align_corners=True) for one block of Pb points.

    img_ids_ref : scalar-prefetch ref (consumed only by the fmap index_map)
    rowidx_ref  : [1, H*W]  float row index of every fmap token (precomputed)
    colidx_ref  : [1, H*W]  float col index of every fmap token (precomputed)
    pts_ref     : [Pb, 2]   normalized (y, x) in [0, 1]
    fmap_ref    : [1, H*W, C]  bf16 feature map (no per-step cast)
    out_ref     : [Pb, C]   f32
    """
    del img_ids_ref
    pts = pts_ref[...]
    py = pts[:, 0:1] * (H - 1.0)            # [Pb, 1] pixel y (align_corners=True)
    px = pts[:, 1:2] * (W - 1.0)            # [Pb, 1] pixel x
    # Bilinear "hat" weights: weight of token at (r, c) is
    #   max(0, 1-|r-py|) * max(0, 1-|c-px|)  -- exact bilinear for py,px in range.
    wy = jnp.maximum(1.0 - jnp.abs(rowidx_ref[...] - py), 0.0)   # [Pb, HW]
    wx = jnp.maximum(1.0 - jnp.abs(colidx_ref[...] - px), 0.0)   # [Pb, HW]
    wgt = (wy * wx).astype(jnp.bfloat16)                          # single cast
    # TODO(synk): bf16 interpolation weights (~0.4% rel err) vs torch f32
    # grid_sample; keep f32 weights if exact parity is required.
    out_ref[...] = jnp.dot(wgt, fmap_ref[0], preferred_element_type=jnp.float32)


def _knn_kernel(src_ref, dstT_ref, idx_ref, *, K):
    """Pairwise squared distances + fused K-smallest selection (VPU/XLU only).

    src_ref : [Bt, S, 2]   query points
    dstT_ref: [Bt, 2, N]   all points, coordinate-major
    idx_ref : [Bt, S, K]   int32 indices of the K nearest points
    """
    src = src_ref[...]
    dstT = dstT_ref[...]
    sy = src[:, :, 0:1]
    sx = src[:, :, 1:2]
    dy = dstT[:, 0:1, :]
    dx = dstT[:, 1:2, :]
    ddy = sy - dy
    ddx = sx - dx
    dist = ddy * ddy + ddx * ddx                       # [Bt, S, N] exact (a-b)^2
    N = dist.shape[-1]
    iota = jax.lax.broadcasted_iota(jnp.float32, dist.shape, 2)
    cols = []
    for _ in range(K):                                 # K iterative min + mask passes
        m = jnp.min(dist, axis=-1, keepdims=True)
        sel = jnp.min(jnp.where(dist == m, iota, float(N)), axis=-1, keepdims=True)
        cols.append(sel)
        dist = jnp.where(iota == sel, jnp.inf, dist)
    idx_ref[...] = jnp.concatenate(cols, axis=-1).astype(jnp.int32)


def _stage_kernel(gfea_ref, gpts_ref, afea_ref, apts_ref,
                  wcf_ref, wcp_ref, wc2f_ref, wc2p_ref,
                  b_ref, gamma_ref, beta_ref, out_ref):
    """Fused per-stage compute for a block of Rb regions.

    gfea_ref : [Rb, S, K, C]  bf16 grouped neighbor features
    gpts_ref : [Rb, S, K, 2]  f32  grouped neighbor coords
    afea_ref : [Rb, S, C]     bf16 anchor features
    apts_ref : [Rb, S, 2]     f32  anchor coords
    out_ref  : [Rb, S, C]     f32
    The diff_projector Linear has been folded into the Conv1d weight at init:
      h = diff @ (Wc1 Wd)^T + anchor @ Wc2^T + (bd Wc1^T + bc)
    wcf/wcp are the (feature, coord) splits of (Wc1 Wd)^T, wc2f/wc2p of Wc2^T.
    Feature-weight blocks arrive as bf16 (no per-step cast); coordinate (2-wide)
    contributions are done with VPU broadcasts, not the MXU.
    """
    Rb, S, K, C = gfea_ref.shape
    M = Rb * S

    afea_bf = afea_ref[...].reshape(M, C)                    # bf16 [M, C]
    afea = afea_bf.astype(jnp.float32)
    apts = apts_ref[...].reshape(M, 2)                       # [M, 2]
    wcp = wcp_ref[...]                                       # [2, C]
    wc2p = wc2p_ref[...]                                     # [2, C]

    # anchor contribution (per (r, s))
    a_term = jnp.dot(afea_bf, wc2f_ref[...], preferred_element_type=jnp.float32)
    a_term = a_term + apts[:, 0:1] * wc2p[0:1, :] + apts[:, 1:2] * wc2p[1:2, :]
    a_term = a_term + b_ref[...]

    # diff contribution (per (r, s, k))
    gfea = gfea_ref[...].reshape(M, K, C).astype(jnp.float32)
    gpts = gpts_ref[...].reshape(M, K, 2)
    dfea = (gfea - afea[:, None, :]).reshape(M * K, C).astype(jnp.bfloat16)
    dpts = (gpts - apts[:, None, :]).reshape(M * K, 2)

    h = jnp.dot(dfea, wcf_ref[...], preferred_element_type=jnp.float32)  # [M*K, C]
    h = h + dpts[:, 0:1] * wcp[0:1, :] + dpts[:, 1:2] * wcp[1:2, :]
    h = h.reshape(M, K, C) + a_term[:, None, :]

    # ReLU
    h = jnp.maximum(h, 0.0)

    # LayerNorm over channel axis (eps=1e-5, biased variance)
    mu = jnp.mean(h, axis=-1, keepdims=True)
    var = jnp.mean((h - mu) * (h - mu), axis=-1, keepdims=True)
    h = (h - mu) * jax.lax.rsqrt(var + 1e-5)
    h = h * gamma_ref[...] + beta_ref[...]

    # AvgPool1d(kernel_size=K): mean over neighbors
    # TODO(synk): last dim C=32 < 128 -> masked stores; a lane-dense (Rb, S*C)
    # output slab would need an in-kernel minor-dim reshape (bundle-verify first).
    out_ref[...] = jnp.mean(h, axis=1).reshape(Rb, S, C)


def _final_proj_kernel(x_ref, w1_ref, b1_ref, w2_ref, b2_ref, out_ref):
    """flatten_projector followed by dim_projector (two linears)."""
    x = x_ref[...]
    h = jax.lax.dot_general(x, w1_ref[...], (((1,), (1,)), ((), ())),
                            preferred_element_type=jnp.float32) + b1_ref[...]
    out_ref[...] = jax.lax.dot_general(h, w2_ref[...], (((1,), (1,)), ((), ())),
                                       preferred_element_type=jnp.float32) + b2_ref[...]


# ----------------------------------------------------------------------------
# Pallas wrappers
# ----------------------------------------------------------------------------

def point_sample_pallas(pts_all, fmaps, block_img_ids, row_idx, col_idx, H, W, Pb):
    """One launch for all images: pts_all [T, 2] (T = n_blocks*Pb), fmaps [n_img, HW, C]."""
    T = pts_all.shape[0]
    n_img, HW, C = fmaps.shape
    n_blocks = T // Pb
    kernel = functools.partial(_point_sample_kernel, H=float(H), W=float(W))
    return pl.pallas_call(
        kernel,
        grid_spec=pltpu.PrefetchScalarGridSpec(
            num_scalar_prefetch=1,
            grid=(n_blocks,),
            in_specs=[
                pl.BlockSpec((1, HW), lambda b, ids: (0, 0)),             # row idx
                pl.BlockSpec((1, HW), lambda b, ids: (0, 0)),             # col idx
                pl.BlockSpec((Pb, 2), lambda b, ids: (b, 0)),             # points
                pl.BlockSpec((1, HW, C), lambda b, ids: (ids[b], 0, 0)),  # fmap (bf16)
            ],
            out_specs=pl.BlockSpec((Pb, C), lambda b, ids: (b, 0)),
        ),
        out_shape=jax.ShapeDtypeStruct((T, C), jnp.float32),
        compiler_params=pltpu.CompilerParams(
            dimension_semantics=("parallel",),
            vmem_limit_bytes=_VMEM_LIMIT),
    )(block_img_ids, row_idx, col_idx,
      pts_all.astype(jnp.float32), fmaps.astype(jnp.bfloat16))


def knn_pallas(src, dst, K, bt=64):
    """src [R, S, 2] queries, dst [R, N, 2] all points -> [R, S, K] int32 KNN indices."""
    R, S, _ = src.shape
    _, N, _ = dst.shape
    assert K <= N
    bt = min(bt, R)
    R_pad = -(-R // bt) * bt
    src = src.astype(jnp.float32)
    dst_t = jnp.transpose(dst.astype(jnp.float32), (0, 2, 1))       # [R, 2, N]
    if R_pad != R:
        src = jnp.pad(src, ((0, R_pad - R), (0, 0), (0, 0)))
        dst_t = jnp.pad(dst_t, ((0, R_pad - R), (0, 0), (0, 0)))
    out = pl.pallas_call(
        functools.partial(_knn_kernel, K=K),
        grid=(R_pad // bt,),
        in_specs=[pl.BlockSpec((bt, S, 2), lambda r: (r, 0, 0)),
                  pl.BlockSpec((bt, 2, N), lambda r: (r, 0, 0))],
        out_specs=pl.BlockSpec((bt, S, K), lambda r: (r, 0, 0)),
        out_shape=jax.ShapeDtypeStruct((R_pad, S, K), jnp.int32),
        compiler_params=pltpu.CompilerParams(dimension_semantics=("parallel",)),
    )(src, dst_t)
    return out[:R]


def stage_pallas(gfea, gpts, afea, apts, p, rb=32):
    """Fused stage over all regions; rb regions are folded per grid step."""
    R, S, K, C = gfea.shape
    rb = min(rb, R)
    R_pad = -(-R // rb) * rb
    # bf16 at the pallas_call boundary for the large feature operands (halves DMA).
    gfea = gfea.astype(jnp.bfloat16)
    afea = afea.astype(jnp.bfloat16)
    gpts = gpts.astype(jnp.float32)
    apts = apts.astype(jnp.float32)
    if R_pad != R:
        pad4 = ((0, R_pad - R), (0, 0), (0, 0), (0, 0))
        pad3 = ((0, R_pad - R), (0, 0), (0, 0))
        gfea = jnp.pad(gfea, pad4)
        gpts = jnp.pad(gpts, pad4)
        afea = jnp.pad(afea, pad3)
        apts = jnp.pad(apts, pad3)
    out = pl.pallas_call(
        _stage_kernel,
        grid=(R_pad // rb,),
        in_specs=[
            pl.BlockSpec((rb, S, K, C), lambda r: (r, 0, 0, 0)),
            pl.BlockSpec((rb, S, K, 2), lambda r: (r, 0, 0, 0)),
            pl.BlockSpec((rb, S, C), lambda r: (r, 0, 0)),
            pl.BlockSpec((rb, S, 2), lambda r: (r, 0, 0)),
            pl.BlockSpec((C, C), lambda r: (0, 0)),
            pl.BlockSpec((2, C), lambda r: (0, 0)),
            pl.BlockSpec((C, C), lambda r: (0, 0)),
            pl.BlockSpec((2, C), lambda r: (0, 0)),
            pl.BlockSpec((1, C), lambda r: (0, 0)),
            pl.BlockSpec((1, C), lambda r: (0, 0)),
            pl.BlockSpec((1, C), lambda r: (0, 0)),
        ],
        out_specs=pl.BlockSpec((rb, S, C), lambda r: (r, 0, 0)),
        out_shape=jax.ShapeDtypeStruct((R_pad, S, C), jnp.float32),
        compiler_params=pltpu.CompilerParams(
            dimension_semantics=("parallel",),
            vmem_limit_bytes=_VMEM_LIMIT),
    )(gfea, gpts, afea, apts,
      p['wcf_t'], p['wcp_t'], p['wc2f_t'], p['wc2p_t'],
      p['bcomb'], p['gamma'], p['beta'])
    return out[:R]


def final_proj_pallas(x, w1, b1, w2, b2, rb=128):
    """flatten_projector + dim_projector, blocked over rows for large R."""
    R, D = x.shape
    out_dim = w2.shape[0]
    rb = min(rb, R)
    R_pad = -(-R // rb) * rb
    x = x.astype(jnp.float32)
    if R_pad != R:
        x = jnp.pad(x, ((0, R_pad - R), (0, 0)))
    out = pl.pallas_call(
        _final_proj_kernel,
        grid=(R_pad // rb,),
        in_specs=[pl.BlockSpec((rb, D), lambda r: (r, 0)),
                  pl.BlockSpec(w1.shape, lambda r: (0, 0)),
                  pl.BlockSpec(b1.shape, lambda r: (0, 0)),
                  pl.BlockSpec(w2.shape, lambda r: (0, 0)),
                  pl.BlockSpec(b2.shape, lambda r: (0, 0))],
        out_specs=pl.BlockSpec((rb, out_dim), lambda r: (r, 0)),
        out_shape=jax.ShapeDtypeStruct((R_pad, out_dim), jnp.float32),
        compiler_params=pltpu.CompilerParams(dimension_semantics=("parallel",)),
    )(x, w1, b1, w2, b2)
    return out[:R]


# ----------------------------------------------------------------------------
# Plain-JAX / numpy glue (sequential / data-dependent pieces)
# ----------------------------------------------------------------------------

def farthest_point_sample(xyz, npoint):
    """xyz: [B, N, 2] -> centroids [B, npoint] int32.
    Deterministic initial point (index 0) instead of torch.randint."""
    B, N, _ = xyz.shape

    def body(i, carry):
        centroids, distance, farthest = carry
        centroids = centroids.at[:, i].set(farthest)
        idx = jnp.broadcast_to(farthest[:, None, None], (B, 1, 2))
        centroid = jnp.take_along_axis(xyz, idx, axis=1)          # [B, 1, 2]
        dist = jnp.sum((xyz - centroid) ** 2, axis=-1)            # [B, N]
        distance = jnp.minimum(distance, dist)
        farthest = jnp.argmax(distance, axis=-1).astype(jnp.int32)
        return centroids, distance, farthest

    init = (jnp.zeros((B, npoint), jnp.int32),
            jnp.full((B, N), 1e10, jnp.float32),
            jnp.zeros((B,), jnp.int32))
    centroids, _, _ = jax.lax.fori_loop(0, npoint, body, init)
    return centroids


def index_points(points, idx):
    """points: [B, N, C], idx: [B, ...] int -> [B, ..., C]."""
    C = points.shape[-1]
    B = idx.shape[0]
    flat = idx.reshape(B, -1)
    gathered = jnp.take_along_axis(
        points, jnp.broadcast_to(flat[:, :, None], (B, flat.shape[1], C)), axis=1)
    return gathered.reshape(idx.shape + (C,))


def _sample_repeat_np(coords, max_len):
    # TODO(synk): torch uses randperm/randint here; deterministic selection instead.
    n = coords.shape[0]
    if n == max_len:
        return coords
    if n > max_len:
        sel = np.linspace(0, n - 1, max_len).round().astype(np.int64)
        return coords[sel]
    idx = np.arange(max_len) % n
    return coords[idx]


def _linear_params(key, out_dim, in_dim):
    k1, k2 = jax.random.split(key)
    bound = 1.0 / math.sqrt(in_dim)
    w = jax.random.uniform(k1, (out_dim, in_dim), jnp.float32, -bound, bound)
    b = jax.random.uniform(k2, (1, out_dim), jnp.float32, -bound, bound)
    return w, b


# ----------------------------------------------------------------------------
# GeoRegionSampler (Pallas version)
# ----------------------------------------------------------------------------

class GeoRegionSamplerPallas:
    def __init__(self, input_dim, output_dim, num_init_point, num_sub_point,
                 num_neighbor, key, pooler_mode='mean',
                 point_block=512, region_block=32, knn_block=64):
        assert pooler_mode == 'mean'
        self.input_dim = input_dim
        self.output_dim = output_dim
        self.num_init_point = num_init_point
        self.num_sub_point = list(num_sub_point)
        self.num_neighbor = list(num_neighbor)
        self.point_block = int(point_block)     # Pb: points per point-sample grid step
        self.region_block = int(region_block)   # Rb: regions per stage grid step
        self.knn_block = int(knn_block)         # Bt: regions per knn grid step

        C = input_dim
        D = input_dim + 2
        keys = jax.random.split(key, 2 * len(num_sub_point) + 2)
        self.stages = []
        for ii in range(len(num_sub_point)):
            wd, bd = _linear_params(keys[2 * ii], D, D)                  # diff_projector
            wc, bc = _linear_params(keys[2 * ii + 1], C, 2 * D)          # Conv1d(2D->C, k=1)
            wc1 = wc[:, :D]
            wc2 = wc[:, D:]
            # Fold the diff Linear into the Conv1d weight (exact affine refactor):
            #   Wc1 (Wd diff + bd) + Wc2 anchor + bc
            # = (Wc1 Wd) diff + Wc2 anchor + (bd Wc1^T + bc)
            A = wc1 @ wd                                                 # [C, D]
            self.stages.append(dict(
                # feature-part weights stored bf16 (MXU operands, no per-step cast)
                wcf_t=jnp.asarray(A[:, :C].T, dtype=jnp.bfloat16),   # [C, C]
                wcp_t=jnp.asarray(A[:, C:].T, dtype=jnp.float32),    # [2, C] coord part
                wc2f_t=jnp.asarray(wc2[:, :C].T, dtype=jnp.bfloat16),
                wc2p_t=jnp.asarray(wc2[:, C:].T, dtype=jnp.float32),
                bcomb=jnp.asarray(bd @ wc1.T + bc, dtype=jnp.float32),   # [1, C]
                gamma=jnp.ones((1, C), jnp.float32),
                beta=jnp.zeros((1, C), jnp.float32),
            ))
        self.w_flat, self.b_flat = _linear_params(
            keys[-2], C, C * num_sub_point[-1])
        self.w_dim, self.b_dim = _linear_params(keys[-1], output_dim, C)

    def forward(self, feature_map, region_masks,
                original_dtype=jnp.float32, return_dtype=jnp.float32):
        assert len(feature_map) == len(region_masks)
        P = self.num_init_point
        Pb = self.point_block

        # ---- host-side: extract per-region points (ragged mask sizes) ----
        pts_chunks, block_img_ids, meta = [], [], []
        offset = 0
        for img_idx, masks_i in enumerate(region_masks):
            if len(masks_i) == 0:
                continue
            H_img, W_img = np.asarray(masks_i[0]).shape
            pts_list = []
            for m in masks_i:
                nz = np.stack(np.nonzero(np.asarray(m)), axis=-1).astype(np.float32)
                nz = nz / np.array([H_img, W_img], np.float32)       # (y, x) in [0, 1)
                pts_list.append(_sample_repeat_np(nz, P))
            pts = np.stack(pts_list)                                  # [R_i, P, 2]
            flat = pts.reshape(-1, 2)
            n = flat.shape[0]
            n_blk = -(-n // Pb)
            if n_blk * Pb != n:
                flat = np.concatenate(
                    [flat, np.zeros((n_blk * Pb - n, 2), np.float32)], axis=0)
            pts_chunks.append(flat)
            block_img_ids.extend([img_idx] * n_blk)
            meta.append((img_idx, pts.shape[0], offset, n, pts))
            offset += n_blk * Pb

        if not meta:
            return [None] * len(region_masks)

        # ---- one batched Pallas launch for bilinear point sampling ----
        shapes = {tuple(np.asarray(f).shape) for f in feature_map}
        assert len(shapes) == 1, "all feature maps must share [H*W, C]"
        # TODO(synk): feature maps of mixed spatial size would need one launch per size.
        hw, c = feature_map[0].shape
        h = w = int(math.sqrt(hw))
        assert h * w == hw, "feature map must be square (h == w)"
        fmaps = jnp.stack([jnp.asarray(f).astype(original_dtype)
                           for f in feature_map], axis=0)

        pts_all = jnp.asarray(np.concatenate(pts_chunks, axis=0))          # [T, 2]
        block_ids = jnp.asarray(np.asarray(block_img_ids, np.int32))       # [n_blocks]
        row_idx = jnp.asarray((np.arange(hw, dtype=np.float32) // w)[None, :])
        col_idx = jnp.asarray((np.arange(hw, dtype=np.float32) % w)[None, :])

        fea_all = point_sample_pallas(pts_all, fmaps, block_ids, row_idx, col_idx,
                                      h, w, Pb).astype(return_dtype)

        all_points, all_fea, all_img_ids = [], [], []
        for img_idx, R_i, off, n, pts_np in meta:
            all_points.append(jnp.asarray(pts_np, dtype=return_dtype))
            all_fea.append(fea_all[off:off + n].reshape(R_i, P, c))
            all_img_ids.extend([img_idx] * R_i)
        points = jnp.concatenate(all_points, axis=0)          # [R, P, 2]
        fea = jnp.concatenate(all_fea, axis=0)                # [R, P, C]
        img_ids = np.asarray(all_img_ids)

        # ---- hierarchical geometric aggregation stages ----
        for stage_i in range(len(self.num_sub_point)):
            S = self.num_sub_point[stage_i]
            K = self.num_neighbor[stage_i]

            fps_idx = farthest_point_sample(points, S)                # [R, S]
            new_points = index_points(points, fps_idx)                # [R, S, 2]
            new_fea = index_points(fea, fps_idx)                      # [R, S, C]

            # pairwise distances + fused K-smallest selection in one kernel
            knn_idx = knn_pallas(new_points, points, K, bt=self.knn_block)  # [R, S, K]

            grouped_points = index_points(points, knn_idx)            # [R, S, K, 2]
            grouped_fea = index_points(fea, knn_idx)                  # [R, S, K, C]
            # TODO(synk): the neighbor gathers could move into the stage kernel via
            # scalar-prefetched knn_idx to avoid the K-duplicated HBM copy.

            fea = stage_pallas(grouped_fea, grouped_points, new_fea, new_points,
                               self.stages[stage_i], rb=self.region_block)   # [R, S, C]
            points = new_points

        x = fea.reshape(fea.shape[0], -1)                             # [R, S_last*C]
        all_region_fea = final_proj_pallas(x, self.w_flat, self.b_flat,
                                           self.w_dim, self.b_dim)    # [R, out_dim]
        all_region_fea = all_region_fea.astype(return_dtype)

        output_region_fea = []
        for img_idx in range(len(region_masks)):
            sel = np.nonzero(img_ids == img_idx)[0]
            if sel.size == 0:
                output_region_fea.append(None)
            else:
                output_region_fea.append(all_region_fea[jnp.asarray(sel)])
        return output_region_fea


# ----------------------------------------------------------------------------
# Example run
# ----------------------------------------------------------------------------

if __name__ == "__main__":
    key = jax.random.PRNGKey(0)
    C = 32               # input_dim
    H = W = 16           # feature-map spatial size (h*w = 256 tokens)

    kf0, kf1, kparam = jax.random.split(key, 3)
    fmap0 = jax.random.normal(kf0, (H * W, C), jnp.float32)
    fmap1 = jax.random.normal(kf1, (H * W, C), jnp.float32)

    # binary region masks on a 32x32 image grid
    mask_a = np.zeros((32, 32), np.float32); mask_a[4:14, 6:20] = 1.0   # 140 pts (> num_init_point)
    mask_b = np.zeros((32, 32), np.float32); mask_b[20:28, 2:10] = 1.0  # 64 pts (== num_init_point)
    mask_c = np.zeros((32, 32), np.float32); mask_c[10:16, 10:16] = 1.0 # 36 pts (< num_init_point)

    sampler = GeoRegionSamplerPallas(
        input_dim=C, output_dim=32,
        num_init_point=64, num_sub_point=[32, 16], num_neighbor=[8, 8],
        key=kparam)

    out = sampler.forward(
        feature_map=[fmap0, fmap1],
        region_masks=[[mask_a, mask_b], [mask_c]],
        original_dtype=jnp.float32, return_dtype=jnp.float32)

    for o in out:
        if o is not None:
            jax.block_until_ready(o)

    assert out[0].shape == (2, 32) and out[1].shape == (1, 32)
    assert np.all(np.isfinite(np.asarray(out[0]))) and np.all(np.isfinite(np.asarray(out[1])))
    print("KERNEL_OK")
</pallas_src>

<mosaic_0001>
module attributes {stable_mosaic.version = 11 : i64} {
  func.func @_point_sample_kernel(%arg0: i32, %arg1: memref<2xi32, #tpu.memory_space<smem>>, %arg2: memref<1x256xf32, #tpu.memory_space<vmem>>, %arg3: memref<1x256xf32, #tpu.memory_space<vmem>>, %arg4: memref<512x2xf32, #tpu.memory_space<vmem>>, %arg5: memref<1x256x32xbf16, #tpu.memory_space<vmem>>, %arg6: memref<512x32xf32, #tpu.memory_space<vmem>>) attributes {dimension_semantics = [#tpu.dimension_semantics<parallel>], iteration_bounds = array<i64: 2>, scalar_prefetch = 1 : i64, scratch_operands = 0 : i64, tpu.core_type = #tpu.core_type<tc>, window_params = [{pipeline_mode = #tpu.pipeline_mode<synchronous>, transform_indices = @transform_0, window_bounds = array<i64: 1, 256>}, {pipeline_mode = #tpu.pipeline_mode<synchronous>, transform_indices = @transform_1, window_bounds = array<i64: 1, 256>}, {transform_indices = @transform_2, window_bounds = array<i64: 512, 2>}, {transform_indices = @transform_3, window_bounds = array<i64: 1, 256, 32>}, {transform_indices = @transform_4, window_bounds = array<i64: 512, 32>}]} {
    %c0 = arith.constant 0 : index
    %c0_0 = arith.constant 0 : index
    %0 = vector.load %arg4[%c0, %c0_0] : memref<512x2xf32, #tpu.memory_space<vmem>>, vector<512x2xf32>
    %1 = vector.extract_strided_slice %0 {offsets = [0, 0], sizes = [512, 1], strides = [1, 1]} : vector<512x2xf32> to vector<512x1xf32>
    %cst = arith.constant 1.500000e+01 : f32
    %2 = vector.broadcast %cst : f32 to vector<512x1xf32>
    %3 = arith.mulf %1, %2 : vector<512x1xf32>
    %4 = vector.extract_strided_slice %0 {offsets = [0, 1], sizes = [512, 1], strides = [1, 1]} : vector<512x2xf32> to vector<512x1xf32>
    %cst_1 = arith.constant 1.500000e+01 : f32
    %5 = vector.broadcast %cst_1 : f32 to vector<512x1xf32>
    %6 = arith.mulf %4, %5 : vector<512x1xf32>
    %c0_2 = arith.constant 0 : index
    %c0_3 = arith.constant 0 : index
    %7 = vector.load %arg2[%c0_2, %c0_3] : memref<1x256xf32, #tpu.memory_space<vmem>>, vector<1x256xf32>
    %8 = vector.broadcast %7 : vector<1x256xf32> to vector<512x256xf32>
    %9 = vector.broadcast %3 : vector<512x1xf32> to vector<512x256xf32>
    %10 = arith.subf %8, %9 : vector<512x256xf32>
    %11 = math.absf %10 : vector<512x256xf32>
    %cst_4 = arith.constant 1.000000e+00 : f32
    %12 = vector.broadcast %cst_4 : f32 to vector<512x256xf32>
    %13 = arith.subf %12, %11 : vector<512x256xf32>
    %cst_5 = arith.constant 0.000000e+00 : f32
    %14 = vector.broadcast %cst_5 : f32 to vector<512x256xf32>
    %15 = arith.maximumf %13, %14 : vector<512x256xf32>
    %c0_6 = arith.constant 0 : index
    %c0_7 = arith.constant 0 : index
    %16 = vector.load %arg3[%c0_6, %c0_7] : memref<1x256xf32, #tpu.memory_space<vmem>>, vector<1x256xf32>
    %17 = vector.broadcast %16 : vector<1x256xf32> to vector<512x256xf32>
    %18 = vector.broadcast %6 : vector<512x1xf32> to vector<512x256xf32>
    %19 = arith.subf %17, %18 : vector<512x256xf32>
    %20 = math.absf %19 : vector<512x256xf32>
    %cst_8 = arith.constant 1.000000e+00 : f32
    %21 = vector.broadcast %cst_8 : f32 to vector<512x256xf32>
    %22 = arith.subf %21, %20 : vector<512x256xf32>
    %cst_9 = arith.constant 0.000000e+00 : f32
    %23 = vector.broadcast %cst_9 : f32 to vector<512x256xf32>
    %24 = arith.maximumf %22, %23 : vector<512x256xf32>
    %25 = arith.mulf %15, %24 : vector<512x256xf32>
    %26 = arith.truncf %25 : vector<512x256xf32> to vector<512x256xbf16>
    %c0_10 = arith.constant 0 : index
    %c0_11 = arith.constant 0 : index
    %c0_12 = arith.constant 0 : index
    %27 = vector.load %arg5[%c0_10, %c0_11, %c0_12] : memref<1x256x32xbf16, #tpu.memory_space<vmem>>, vector<1x256x32xbf16>
    %28 = vector.shape_cast %27 : vector<1x256x32xbf16> to vector<256x32xbf16>
    %cst_13 = arith.constant dense<0.000000e+00> : vector<512x32xf32>
    %29 = tpu.matmul %26, %28, %cst_13 {dimension_numbers = #tpu.dot_dimension_numbers<[1], [0], [0], [1], [0, 0, 1, 1], [], []>} : vector<512x256xbf16>, vector<256x32xbf16>, vector<512x32xf32> -> vector<512x32xf32>
    %c0_14 = arith.constant 0 : index
    %c0_15 = arith.constant 0 : index
    %30 = vector.load %arg6[%c0_14, %c0_15] : memref<512x32xf32, #tpu.memory_space<vmem>>, vector<512x32xf32>
    tpu.vector_store %arg6[%c0_14, %c0_15], %29 {strides = array<i32>} : memref<512x32xf32, #tpu.memory_space<vmem>>, vector<512x32xf32>,
    return
  }
  func.func @transform_0(%arg0: i32, %arg1: memref<2xi32, #tpu.memory_space<smem>>) -> (i32, i32) {
    %c0_i32 = arith.constant 0 : i32
    %c0_i32_0 = arith.constant 0 : i32
    %c0_i32_1 = arith.constant 0 : i32
    return %c0_i32, %c0_i32_0 : i32, i32
  }
  func.func @transform_1(%arg0: i32, %arg1: memref<2xi32, #tpu.memory_space<smem>>) -> (i32, i32) {
    %c0_i32 = arith.constant 0 : i32
    %c0_i32_0 = arith.constant 0 : i32
    %c0_i32_1 = arith.constant 0 : i32
    return %c0_i32, %c0_i32_0 : i32, i32
  }
  func.func @transform_2(%arg0: i32, %arg1: memref<2xi32, #tpu.memory_space<smem>>) -> (i32, i32) {
    %c0_i32 = arith.constant 0 : i32
    %c0_i32_0 = arith.constant 0 : i32
    return %arg0, %c0_i32 : i32, i32
  }
  func.func @transform_3(%arg0: i32, %arg1: memref<2xi32, #tpu.memory_space<smem>>) -> (i32, i32, i32) {
    %0 = arith.index_cast %arg0 : i32 to index
    %1 = memref.load %arg1[%0] : memref<2xi32, #tpu.memory_space<smem>>
    %c0_i32 = arith.constant 0 : i32
    %c0_i32_0 = arith.constant 0 : i32
    %c0_i32_1 = arith.constant 0 : i32
    return %1, %c0_i32, %c0_i32_0 : i32, i32, i32
  }
  func.func @transform_4(%arg0: i32, %arg1: memref<2xi32, #tpu.memory_space<smem>>) -> (i32, i32) {
    %c0_i32 = arith.constant 0 : i32
    %c0_i32_0 = arith.constant 0 : i32
    return %arg0, %c0_i32 : i32, i32
  }
}

</mosaic_0001>

<llo_original>
// kernel: tpu_custom_call.1
$region0: #{tpu_custom_call.1}
  #allocation0 [shape = 'u32[]', space=smem, size = 0x4, offset = 0x4, fixed_abs, tag = 'smem constant byte address 0x4 - core index']
  #allocation1 [shape = 'u32[144,128]{1,0:T(1,128)}', space=vmem, size = 0x12000, scoped, tag = 'internal scratch']
  #allocation2 [shape = 's32[1]{0}', space=sflag, size = 0x4, scoped, tag = 'scoped memory for tpu_custom_call.1']
  #allocation3 [shape = 'u8[512]{0}', space=smem, size = 0x200, scoped, tag = 'prefetched SMEM operand 0']
  %s0 = inlined_call_operand.vmem [shape: s32[2], index: 0, kind: input, shape index: {}]
  %s1 = inlined_call_operand.vmem [shape: f32[1,256], index: 1, kind: input, shape index: {}]
  %s2 = inlined_call_operand.vmem [shape: f32[1,256], index: 2, kind: input, shape index: {}]
  %s3 = inlined_call_operand.vmem [shape: f32[1024,2], index: 3, kind: input, shape index: {}]
  %s4 = inlined_call_operand.vmem [shape: bf16[2,256,32], index: 4, kind: input, shape index: {}]
  %s5 = inlined_call_operand.vmem [shape: f32[1024,32], index: 5, kind: output, shape index: {}]
  %s6 = sld [smem:[#allocation0]]
  $region49: #{tpu_custom_call.1} parent=0
    _
  %s8 = ssub.s32 1, %s6
  %s9 = scalar_select 0, %s8, %s6
  %s10 = sshll.u32 %s0, 4
  %s11 = int_to_ptr.vmem [resolvable:$true] %s10
  %13 = dma.vmem_to_smem %s11, 16, [#allocation3], [#allocation2]
  %14 = dma.done [#allocation2], 16
  %15 = sfence
  loop: start=0, step=1, limit=4
  $region2: #{tpu_custom_call.1} parent=0 // loop_pre_header
    _
  $region3: #{tpu_custom_call.1} parent=0 // loop_header
    %s17 = sphi 0, %s21
    %p18 = scmp.ge.s32.totalorder %s17, 4
    %s25 = sphi 0, %s25
    %s27 = sphi 0, %s25
    %s28 = sphi 0, %s27
    %s42 = sphi 0, %s28
    %s46 = sphi 0, %s46
    %s48 = sphi 0, %s46
    %s49 = sphi 0, %s48
    %s63 = sphi 0, %s49
    %s69 = sphi 0, %s71
    %s72 = sphi 0, %s69
    %s73 = sphi 0, %s72
    %s89 = sphi 0, %s73
    %s97 = sphi 0, %s99
    %s100 = sphi 0, %s97
    %s101 = sphi 0, %s100
    %s117 = sphi 0, %s101
    %s123 = sphi 0, %s125
    %s126 = sphi 0, %s123
    %s127 = sphi 0, %s126
    %s143 = sphi 0, %s127
  $region4: #{tpu_custom_call.1} parent=0 // loop_header_branch
    %20 = sbr.rel (%p18) target = $region8
  $region5: #{tpu_custom_call.1} parent=0 // loop_body
    %s22 = ssub.s32 %s17, 1
    %s23 = ssub.s32 %s17, 2
    %s24 = sadd.s32 %s17, 1
    %s26 = sadd.s32 %s25, 1
    %p29 = scmp.eq.s32.totalorder %s17, 1
    %p30 = scmp.ne.s32.totalorder %s25, %s27
    %p31 = scmp.eq.s32.totalorder %s17, 0
    %p32 = por %p30, %p31
    %p33 = scmp.ne.s32.totalorder %s25, %s27
    %p34 = scmp.eq.s32.totalorder %s22, 1
    %p35 = por %p33, %p34
    %p36 = scmp.ne.s32.totalorder %s27, %s28
    %p37 = scmp.eq.s32.totalorder %s22, 0
    %p38 = por %p36, %p37
    %p39 = scmp.ne.s32.totalorder %s27, %s28
    %p40 = scmp.eq.s32.totalorder %s23, 1
    %p41 = por %p39, %p40
    %p43 = scmp.ne.s32.totalorder %s28, %s42
    %p44 = scmp.eq.s32.totalorder %s23, 0
    %p45 = por %p43, %p44
    %s47 = sadd.s32 %s46, 1
    %p50 = scmp.eq.s32.totalorder %s17, 1
    %p51 = scmp.ne.s32.totalorder %s46, %s48
    %p52 = scmp.eq.s32.totalorder %s17, 0
    %p53 = por %p51, %p52
    %p54 = scmp.ne.s32.totalorder %s46, %s48
    %p55 = scmp.eq.s32.totalorder %s22, 1
    %p56 = por %p54, %p55
    %p57 = scmp.ne.s32.totalorder %s48, %s49
    %p58 = scmp.eq.s32.totalorder %s22, 0
    %p59 = por %p57, %p58
    %p60 = scmp.ne.s32.totalorder %s48, %s49
    %p61 = scmp.eq.s32.totalorder %s23, 1
    %p62 = por %p60, %p61
    %p64 = scmp.ne.s32.totalorder %s49, %s63
    %p65 = scmp.eq.s32.totalorder %s23, 0
    %p66 = por %p64, %p65
    %s67 = ssub.s32 %s17, %s24
    %p68 = scmp.eq.s32.totalorder %s67, 0
    %s70 = sadd.s32 %s69, 1
    %s71 = scalar_select %p68, %s69, %s70
    %p74 = pneg %p68
    %p75 = scmp.eq.s32.totalorder %s17, 1
    %p76 = por %p74, %p75
    %p77 = scmp.ne.s32.totalorder %s69, %s72
    %p78 = scmp.eq.s32.totalorder %s17, 0
    %p79 = por %p77, %p78
    %p80 = scmp.ne.s32.totalorder %s69, %s72
    %p81 = scmp.eq.s32.totalorder %s22, 1
    %p82 = por %p80, %p81
    %p83 = scmp.ne.s32.totalorder %s72, %s73
    %p84 = scmp.eq.s32.totalorder %s22, 0
    %p85 = por %p83, %p84
    %p86 = scmp.ne.s32.totalorder %s72, %s73
    %p87 = scmp.eq.s32.totalorder %s23, 1
    %p88 = por %p86, %p87
    %p90 = scmp.ne.s32.totalorder %s73, %s89
    %p91 = scmp.eq.s32.totalorder %s23, 0
    %p92 = por %p90, %p91
    %s93 = sld [smem:[#allocation3 + %s17]]
    %s94 = sld [smem:[#allocation3 + %s24]]
    %s95 = ssub.s32 %s93, %s94
    %p96 = scmp.eq.s32.totalorder %s95, 0
    %s98 = sadd.s32 %s97, 1
    %s99 = scalar_select %p96, %s97, %s98
    %p102 = pneg %p96
    %p103 = scmp.eq.s32.totalorder %s17, 1
    %p104 = por %p102, %p103
    %p105 = scmp.ne.s32.totalorder %s97, %s100
    %p106 = scmp.eq.s32.totalorder %s17, 0
    %p107 = por %p105, %p106
    %p108 = scmp.ne.s32.totalorder %s97, %s100
    %p109 = scmp.eq.s32.totalorder %s22, 1
    %p110 = por %p108, %p109
    %p111 = scmp.ne.s32.totalorder %s100, %s101
    %p112 = scmp.eq.s32.totalorder %s22, 0
    %p113 = por %p111, %p112
    %p114 = scmp.ne.s32.totalorder %s100, %s101
    %p115 = scmp.eq.s32.totalorder %s23, 1
    %p116 = por %p114, %p115
    %p118 = scmp.ne.s32.totalorder %s101, %s117
    %p119 = scmp.eq.s32.totalorder %s23, 0
    %p120 = por %p118, %p119
    %s121 = ssub.s32 %s17, %s24
    %p122 = scmp.eq.s32.totalorder %s121, 0
    %s124 = sadd.s32 %s123, 1
    %s125 = scalar_select %p122, %s123, %s124
    %p128 = pneg %p122
    %p129 = scmp.eq.s32.totalorder %s17, 1
    %p130 = por %p128, %p129
    %p131 = scmp.ne.s32.totalorder %s123, %s126
    %p132 = scmp.eq.s32.totalorder %s17, 0
    %p133 = por %p131, %p132
    %p134 = scmp.ne.s32.totalorder %s123, %s126
    %p135 = scmp.eq.s32.totalorder %s22, 1
    %p136 = por %p134, %p135
    %p137 = scmp.ne.s32.totalorder %s126, %s127
    %p138 = scmp.eq.s32.totalorder %s22, 0
    %p139 = por %p137, %p138
    %p140 = scmp.ne.s32.totalorder %s126, %s127
    %p141 = scmp.eq.s32.totalorder %s23, 1
    %p142 = por %p140, %p141
    %p144 = scmp.ne.s32.totalorder %s127, %s143
    %p145 = scmp.eq.s32.totalorder %s23, 0
    %p146 = por %p144, %p145
    %p147 = scmp.le.s32.totalorder 1, %s17
    %p148 = scmp.lt.s32.totalorder %s17, 3
    %p149 = pnand %p147, %p148
    %p150 = pneg %p149
    // Predicated region
    $region9: #{tpu_custom_call.1} parent=5 // pred_check
      _
    $region10: #{tpu_custom_call.1} parent=5 // pred_check_branch
      %152 = sbr.rel (%p149) target = $region12
    $region11: #{tpu_custom_call.1} parent=5 // pred_region
      %s153 = ssub.s32 %s17, 1
      // Predicated region
      $region13: #{tpu_custom_call.1} parent=11 // pred_check
        %p154 = pneg %p38
      $region14: #{tpu_custom_call.1} parent=11 // pred_check_branch
        %156 = sbr.rel (%p154) target = $region16
      $region15: #{tpu_custom_call.1} parent=11 // pred_region
        _
      $region16: #{tpu_custom_call.1} parent=11 // pred_fallthru
        _
      // Predicated region
      $region17: #{tpu_custom_call.1} parent=11 // pred_check
        %p157 = pneg %p59
      $region18: #{tpu_custom_call.1} parent=11 // pred_check_branch
        %159 = sbr.rel (%p157) target = $region20
      $region19: #{tpu_custom_call.1} parent=11 // pred_region
        _
      $region20: #{tpu_custom_call.1} parent=11 // pred_fallthru
        _
    $region12: #{tpu_custom_call.1} parent=5 // pred_fallthru
      _
    %p160 = scmp.lt.s32.totalorder %s17, 2
    // Predicated region
    $region21: #{tpu_custom_call.1} parent=5 // pred_check
      %p161 = pneg %p160
    $region22: #{tpu_custom_call.1} parent=5 // pred_check_branch
      %163 = sbr.rel (%p161) target = $region24
    $region23: #{tpu_custom_call.1} parent=5 // pred_region
      // Predicated region
      $region25: #{tpu_custom_call.1} parent=23 // pred_check
        %p164 = pneg %p79
      $region26: #{tpu_custom_call.1} parent=23 // pred_check_branch
        %166 = sbr.rel (%p164) target = $region28
      $region27: #{tpu_custom_call.1} parent=23 // pred_region
        %s167 = smul.u32 64, %s17
        %p168 = scmp.lt.s32.totalorder %s167, 127
        %s169 = scalar_select %p168, %s167, 127
        %s170 = smul.addr %s169, 8
        %s171 = scalar_lea.vmem %s3, %s170
        %s172 = smul.u32 64, %s17
      $region28: #{tpu_custom_call.1} parent=23 // pred_fallthru
        _
      // Predicated region
      $region29: #{tpu_custom_call.1} parent=23 // pred_check
        %p173 = pneg %p107
      $region30: #{tpu_custom_call.1} parent=23 // pred_check_branch
        %175 = sbr.rel (%p173) target = $region32
      $region31: #{tpu_custom_call.1} parent=23 // pred_region
        %s176 = sld [smem:[#allocation3 + %s17]]
        %p177 = scmp.lt.s32.totalorder %s176, 1
        %s178 = scalar_select %p177, %s176, 1
        %s179 = smul.addr %s178, 32
        %s180 = smul.addr %s179, 4
        %s181 = scalar_lea.vmem %s4, %s180
        %s182 = sld [smem:[#allocation3 + %s17]]
      $region32: #{tpu_custom_call.1} parent=23 // pred_fallthru
        _
    $region24: #{tpu_custom_call.1} parent=5 // pred_fallthru
      _
    %p183 = scmp.le.s32.totalorder 1, %s17
    %p184 = scmp.lt.s32.totalorder %s17, 3
    %p185 = pnand %p183, %p184
    %p186 = pneg %p185
    // Predicated region
    $region33: #{tpu_custom_call.1} parent=5 // pred_check
      _
    $region34: #{tpu_custom_call.1} parent=5 // pred_check_branch
      %188 = sbr.rel (%p185) target = $region36
    $region35: #{tpu_custom_call.1} parent=5 // pred_region
      %s189 = ssub.s32 %s17, 1
      %p190 = pneg %p38
      %p191 = pneg %p35
      %p192 = pneg %p59
      %p193 = pneg %p56
      %s194 = smul.u32 64, %s22
      %p195 = scmp.lt.s32.totalorder %s194, 127
      %s196 = scalar_select %p195, %s194, 127
      %s197 = smul.addr %s196, 8
      %s198 = scalar_lea.vmem %s3, %s197
      %p199 = pneg %p85
      %p200 = pneg %p82
      %s201 = sld [smem:[#allocation3 + %s22]]
      %p202 = scmp.lt.s32.totalorder %s201, 1
      %s203 = scalar_select %p202, %s201, 1
      %s204 = smul.addr %s203, 32
      %s205 = smul.addr %s204, 4
      %s206 = scalar_lea.vmem %s4, %s205
      %p207 = pneg %p113
      %p208 = pneg %p110
      %p209 = pneg %p139
      %p210 = pneg %p136
      %s211 = smul.u32 64, %s22
      %p212 = scmp.lt.s32.totalorder %s211, 127
      %s213 = scalar_select %p212, %s211, 127
      %s214 = smul.addr %s213, 8
      %s215 = scalar_lea.vmem %s5, %s214
      %s216 = smul.u32 64, %s22
      %p217 = scmp.lt.s32.totalorder %s216, 127
      %s218 = scalar_select %p217, %s216, 127
      %s219 = smul.addr %s218, 8
      %s220 = scalar_lea.vmem %s3, %s219
      %s221 = smul.u32 64, %s22
      %s222 = sld [smem:[#allocation3 + %s22]]
      %p223 = scmp.lt.s32.totalorder %s222, 1
      %s224 = scalar_select %p223, %s222, 1
      %s225 = smul.addr %s224, 32
      %s226 = smul.addr %s225, 4
      %s227 = scalar_lea.vmem %s4, %s226
      %s228 = sld [smem:[#allocation3 + %s22]]
      %s229 = smul.u32 64, %s22
      %p230 = scmp.lt.s32.totalorder %s229, 127
      %s231 = scalar_select %p230, %s229, 127
      %s232 = smul.addr %s231, 8
      %s233 = scalar_lea.vmem %s5, %s232
      %s234 = smul.u32 64, %s22
      %v236 = vld [vmem:[%s220] sm:$0xff]
      %v237 = vld [vmem:[%s220 + $0x8] sm:$0xff]
      %v238 = vld [vmem:[%s220 + $0x10] sm:$0xff]
      %v239 = vld [vmem:[%s220 + $0x18] sm:$0xff]
      %v240 = vld [vmem:[%s220 + $0x20] sm:$0xff]
      %v241 = vld [vmem:[%s220 + $0x28] sm:$0xff]
      %v242 = vld [vmem:[%s220 + $0x30] sm:$0xff]
      %v243 = vld [vmem:[%s220 + $0x38] sm:$0xff]
      %v244 = vld [vmem:[%s220 + $0x40] sm:$0xff]
      %v245 = vld [vmem:[%s220 + $0x48] sm:$0xff]
      %v246 = vld [vmem:[%s220 + $0x50] sm:$0xff]
      %v247 = vld [vmem:[%s220 + $0x58] sm:$0xff]
      %v248 = vld [vmem:[%s220 + $0x60] sm:$0xff]
      %v249 = vld [vmem:[%s220 + $0x68] sm:$0xff]
      %v250 = vld [vmem:[%s220 + $0x70] sm:$0xff]
      %v251 = vld [vmem:[%s220 + $0x78] sm:$0xff]
      %v252 = vld [vmem:[%s220 + $0x80] sm:$0xff]
      %v253 = vld [vmem:[%s220 + $0x88] sm:$0xff]
      %v254 = vld [vmem:[%s220 + $0x90] sm:$0xff]
      %v255 = vld [vmem:[%s220 + $0x98] sm:$0xff]
      %v256 = vld [vmem:[%s220 + $0xa0] sm:$0xff]
      %v257 = vld [vmem:[%s220 + $0xa8] sm:$0xff]
      %v258 = vld [vmem:[%s220 + $0xb0] sm:$0xff]
      %v259 = vld [vmem:[%s220 + $0xb8] sm:$0xff]
      %v260 = vld [vmem:[%s220 + $0xc0] sm:$0xff]
      %v261 = vld [vmem:[%s220 + $0xc8] sm:$0xff]
      %v262 = vld [vmem:[%s220 + $0xd0] sm:$0xff]
      %v263 = vld [vmem:[%s220 + $0xd8] sm:$0xff]
      %v264 = vld [vmem:[%s220 + $0xe0] sm:$0xff]
      %v265 = vld [vmem:[%s220 + $0xe8] sm:$0xff]
      %v266 = vld [vmem:[%s220 + $0xf0] sm:$0xff]
      %v267 = vld [vmem:[%s220 + $0xf8] sm:$0xff]
      %v268 = vld [vmem:[%s220 + $0x100] sm:$0xff]
      %v269 = vld [vmem:[%s220 + $0x108] sm:$0xff]
      %v270 = vld [vmem:[%s220 + $0x110] sm:$0xff]
      %v271 = vld [vmem:[%s220 + $0x118] sm:$0xff]
      %v272 = vld [vmem:[%s220 + $0x120] sm:$0xff]
      %v273 = vld [vmem:[%s220 + $0x128] sm:$0xff]
      %v274 = vld [vmem:[%s220 + $0x130] sm:$0xff]
      %v275 = vld [vmem:[%s220 + $0x138] sm:$0xff]
      %v276 = vld [vmem:[%s220 + $0x140] sm:$0xff]
      %v277 = vld [vmem:[%s220 + $0x148] sm:$0xff]
      %v278 = vld [vmem:[%s220 + $0x150] sm:$0xff]
      %v279 = vld [vmem:[%s220 + $0x158] sm:$0xff]
      %v280 = vld [vmem:[%s220 + $0x160] sm:$0xff]
      %v281 = vld [vmem:[%s220 + $0x168] sm:$0xff]
      %v282 = vld [vmem:[%s220 + $0x170] sm:$0xff]
      %v283 = vld [vmem:[%s220 + $0x178] sm:$0xff]
      %v284 = vld [vmem:[%s220 + $0x180] sm:$0xff]
      %v285 = vld [vmem:[%s220 + $0x188] sm:$0xff]
      %v286 = vld [vmem:[%s220 + $0x190] sm:$0xff]
      %v287 = vld [vmem:[%s220 + $0x198] sm:$0xff]
      %v288 = vld [vmem:[%s220 + $0x1a0] sm:$0xff]
      %v289 = vld [vmem:[%s220 + $0x1a8] sm:$0xff]
      %v290 = vld [vmem:[%s220 + $0x1b0] sm:$0xff]
      %v291 = vld [vmem:[%s220 + $0x1b8] sm:$0xff]
      %v292 = vld [vmem:[%s220 + $0x1c0] sm:$0xff]
      %v293 = vld [vmem:[%s220 + $0x1c8] sm:$0xff]
      %v294 = vld [vmem:[%s220 + $0x1d0] sm:$0xff]
      %v295 = vld [vmem:[%s220 + $0x1d8] sm:$0xff]
      %v296 = vld [vmem:[%s220 + $0x1e0] sm:$0xff]
      %v297 = vld [vmem:[%s220 + $0x1e8] sm:$0xff]
      %v298 = vld [vmem:[%s220 + $0x1f0] sm:$0xff]
      %v299 = vld [vmem:[%s220 + $0x1f8] sm:$0xff]
      %v300 = vmul.f32 %v236, 15.0
      %v301 = vmul.f32 %v237, 15.0
      %v302 = vmul.f32 %v238, 15.0
      %v303 = vmul.f32 %v239, 15.0
      %v304 = vmul.f32 %v240, 15.0
      %v305 = vmul.f32 %v241, 15.0
      %v306 = vmul.f32 %v242, 15.0
      %v307 = vmul.f32 %v243, 15.0
      %v308 = vmul.f32 %v244, 15.0
      %v309 = vmul.f32 %v245, 15.0
      %v310 = vmul.f32 %v246, 15.0
      %v311 = vmul.f32 %v247, 15.0
      %v312 = vmul.f32 %v248, 15.0
      %v313 = vmul.f32 %v249, 15.0
      %v314 = vmul.f32 %v250, 15.0
      %v315 = vmul.f32 %v251, 15.0
      %v316 = vmul.f32 %v252, 15.0
      %v317 = vmul.f32 %v253, 15.0
      %v318 = vmul.f32 %v254, 15.0
      %v319 = vmul.f32 %v255, 15.0
      %v320 = vmul.f32 %v256, 15.0
      %v321 = vmul.f32 %v257, 15.0
      %v322 = vmul.f32 %v258, 15.0
      %v323 = vmul.f32 %v259, 15.0
      %v324 = vmul.f32 %v260, 15.0
      %v325 = vmul.f32 %v261, 15.0
      %v326 = vmul.f32 %v262, 15.0
      %v327 = vmul.f32 %v263, 15.0
      %v328 = vmul.f32 %v264, 15.0
      %v329 = vmul.f32 %v265, 15.0
      %v330 = vmul.f32 %v266, 15.0
      %v331 = vmul.f32 %v267, 15.0
      %v332 = vmul.f32 %v268, 15.0
      %v333 = vmul.f32 %v269, 15.0
      %v334 = vmul.f32 %v270, 15.0
      %v335 = vmul.f32 %v271, 15.0
      %v336 = vmul.f32 %v272, 15.0
      %v337 = vmul.f32 %v273, 15.0
      %v338 = vmul.f32 %v274, 15.0
      %v339 = vmul.f32 %v275, 15.0
      %v340 = vmul.f32 %v276, 15.0
      %v341 = vmul.f32 %v277, 15.0
      %v342 = vmul.f32 %v278, 15.0
      %v343 = vmul.f32 %v279, 15.0
      %v344 = vmul.f32 %v280, 15.0
      %v345 = vmul.f32 %v281, 15.0
      %v346 = vmul.f32 %v282, 15.0
      %v347 = vmul.f32 %v283, 15.0
      %v348 = vmul.f32 %v284, 15.0
      %v349 = vmul.f32 %v285, 15.0
      %v350 = vmul.f32 %v286, 15.0
      %v351 = vmul.f32 %v287, 15.0
      %v352 = vmul.f32 %v288, 15.0
      %v353 = vmul.f32 %v289, 15.0
      %v354 = vmul.f32 %v290, 15.0
      %v355 = vmul.f32 %v291, 15.0
      %v356 = vmul.f32 %v292, 15.0
      %v357 = vmul.f32 %v293, 15.0
      %v358 = vmul.f32 %v294, 15.0
      %v359 = vmul.f32 %v295, 15.0
      %v360 = vmul.f32 %v296, 15.0
      %v361 = vmul.f32 %v297, 15.0
      %v362 = vmul.f32 %v298, 15.0
      %v363 = vmul.f32 %v299, 15.0
      %v364 = vld [vmem:[%s1] sm:$0x3]
      %v366 = vlaneseq
      %v367 = vshrl.u32 %v366, 7
      %v368 = vsub.s32 0, %v367
      %v369 = vrot.slane %v364, %v368
      %v370 = vlaneseq
      %v371 = vshrl.u32 %v370, 7
      %v372 = vsub.s32 1, %v371
      %v373 = vrot.slane %v364, %v372
      %377 = vset.pattern.permute.xlu0 0
      %378 = vperm.xlu0 %377, %v300
      %v379 = vpop.permute.xlu0 %378
      %382 = vset.pattern.permute.xlu0 0
      %383 = vperm.xlu0 %382, %v301
      %v384 = vpop.permute.xlu0 %383
      %387 = vset.pattern.permute.xlu0 0
      %388 = vperm.xlu0 %387, %v302
      %v389 = vpop.permute.xlu0 %388
      %392 = vset.pattern.permute.xlu0 0
      %393 = vperm.xlu0 %392, %v303
      %v394 = vpop.permute.xlu0 %393
      %397 = vset.pattern.permute.xlu0 0
      %398 = vperm.xlu0 %397, %v304
      %v399 = vpop.permute.xlu0 %398
      %402 = vset.pattern.permute.xlu0 0
      %403 = vperm.xlu0 %402, %v305
      %v404 = vpop.permute.xlu0 %403
      %407 = vset.pattern.permute.xlu0 0
      %408 = vperm.xlu0 %407, %v306
      %v409 = vpop.permute.xlu0 %408
      %412 = vset.pattern.permute.xlu0 0
      %413 = vperm.xlu0 %412, %v307
      %v414 = vpop.permute.xlu0 %413
      %417 = vset.pattern.permute.xlu0 0
      %418 = vperm.xlu0 %417, %v308
      %v419 = vpop.permute.xlu0 %418
      %422 = vset.pattern.permute.xlu0 0
      %423 = vperm.xlu0 %422, %v309
      %v424 = vpop.permute.xlu0 %423
      %427 = vset.pattern.permute.xlu0 0
      %428 = vperm.xlu0 %427, %v310
      %v429 = vpop.permute.xlu0 %428
      %432 = vset.pattern.permute.xlu0 0
      %433 = vperm.xlu0 %432, %v311
      %v434 = vpop.permute.xlu0 %433
      %437 = vset.pattern.permute.xlu0 0
      %438 = vperm.xlu0 %437, %v312
      %v439 = vpop.permute.xlu0 %438
      %442 = vset.pattern.permute.xlu0 0
      %443 = vperm.xlu0 %442, %v313
      %v444 = vpop.permute.xlu0 %443
      %447 = vset.pattern.permute.xlu0 0
      %448 = vperm.xlu0 %447, %v314
      %v449 = vpop.permute.xlu0 %448
      %452 = vset.pattern.permute.xlu0 0
      %453 = vperm.xlu0 %452, %v315
      %v454 = vpop.permute.xlu0 %453
      %457 = vset.pattern.permute.xlu0 0
      %458 = vperm.xlu0 %457, %v316
      %v459 = vpop.permute.xlu0 %458
      %462 = vset.pattern.permute.xlu0 0
      %463 = vperm.xlu0 %462, %v317
      %v464 = vpop.permute.xlu0 %463
      %467 = vset.pattern.permute.xlu0 0
      %468 = vperm.xlu0 %467, %v318
      %v469 = vpop.permute.xlu0 %468
      %472 = vset.pattern.permute.xlu0 0
      %473 = vperm.xlu0 %472, %v319
      %v474 = vpop.permute.xlu0 %473
      %477 = vset.pattern.permute.xlu0 0
      %478 = vperm.xlu0 %477, %v320
      %v479 = vpop.permute.xlu0 %478
      %482 = vset.pattern.permute.xlu0 0
      %483 = vperm.xlu0 %482, %v321
      %v484 = vpop.permute.xlu0 %483
      %487 = vset.pattern.permute.xlu0 0
      %488 = vperm.xlu0 %487, %v322
      %v489 = vpop.permute.xlu0 %488
      %492 = vset.pattern.permute.xlu0 0
      %493 = vperm.xlu0 %492, %v323
      %v494 = vpop.permute.xlu0 %493
      %497 = vset.pattern.permute.xlu0 0
      %498 = vperm.xlu0 %497, %v324
      %v499 = vpop.permute.xlu0 %498
      %502 = vset.pattern.permute.xlu0 0
      %503 = vperm.xlu0 %502, %v325
      %v504 = vpop.permute.xlu0 %503
      %507 = vset.pattern.permute.xlu0 0
      %508 = vperm.xlu0 %507, %v326
      %v509 = vpop.permute.xlu0 %508
      %512 = vset.pattern.permute.xlu0 0
      %513 = vperm.xlu0 %512, %v327
      %v514 = vpop.permute.xlu0 %513
      %517 = vset.pattern.permute.xlu0 0
      %518 = vperm.xlu0 %517, %v328
      %v519 = vpop.permute.xlu0 %518
      %522 = vset.pattern.permute.xlu0 0
      %523 = vperm.xlu0 %522, %v329
      %v524 = vpop.permute.xlu0 %523
      %527 = vset.pattern.permute.xlu0 0
      %528 = vperm.xlu0 %527, %v330
      %v529 = vpop.permute.xlu0 %528
      %532 = vset.pattern.permute.xlu0 0
      %533 = vperm.xlu0 %532, %v331
      %v534 = vpop.permute.xlu0 %533
      %537 = vset.pattern.permute.xlu0 0
      %538 = vperm.xlu0 %537, %v332
      %v539 = vpop.permute.xlu0 %538
      %542 = vset.pattern.permute.xlu0 0
      %543 = vperm.xlu0 %542, %v333
      %v544 = vpop.permute.xlu0 %543
      %547 = vset.pattern.permute.xlu0 0
      %548 = vperm.xlu0 %547, %v334
      %v549 = vpop.permute.xlu0 %548
      %552 = vset.pattern.permute.xlu0 0
      %553 = vperm.xlu0 %552, %v335
      %v554 = vpop.permute.xlu0 %553
      %557 = vset.pattern.permute.xlu0 0
      %558 = vperm.xlu0 %557, %v336
      %v559 = vpop.permute.xlu0 %558
      %562 = vset.pattern.permute.xlu0 0
      %563 = vperm.xlu0 %562, %v337
      %v564 = vpop.permute.xlu0 %563
      %567 = vset.pattern.permute.xlu0 0
      %568 = vperm.xlu0 %567, %v338
      %v569 = vpop.permute.xlu0 %568
      %572 = vset.pattern.permute.xlu0 0
      %573 = vperm.xlu0 %572, %v339
      %v574 = vpop.permute.xlu0 %573
      %577 = vset.pattern.permute.xlu0 0
      %578 = vperm.xlu0 %577, %v340
      %v579 = vpop.permute.xlu0 %578
      %582 = vset.pattern.permute.xlu0 0
      %583 = vperm.xlu0 %582, %v341
      %v584 = vpop.permute.xlu0 %583
      %587 = vset.pattern.permute.xlu0 0
      %588 = vperm.xlu0 %587, %v342
      %v589 = vpop.permute.xlu0 %588
      %592 = vset.pattern.permute.xlu0 0
      %593 = vperm.xlu0 %592, %v343
      %v594 = vpop.permute.xlu0 %593
      %597 = vset.pattern.permute.xlu0 0
      %598 = vperm.xlu0 %597, %v344
      %v599 = vpop.permute.xlu0 %598
      %602 = vset.pattern.permute.xlu0 0
      %603 = vperm.xlu0 %602, %v345
      %v604 = vpop.permute.xlu0 %603
      %607 = vset.pattern.permute.xlu0 0
      %608 = vperm.xlu0 %607, %v346
      %v609 = vpop.permute.xlu0 %608
      %612 = vset.pattern.permute.xlu0 0
      %613 = vperm.xlu0 %612, %v347
      %v614 = vpop.permute.xlu0 %613
      %617 = vset.pattern.permute.xlu0 0
      %618 = vperm.xlu0 %617, %v348
      %v619 = vpop.permute.xlu0 %618
      %622 = vset.pattern.permute.xlu0 0
      %623 = vperm.xlu0 %622, %v349
      %v624 = vpop.permute.xlu0 %623
      %627 = vset.pattern.permute.xlu0 0
      %628 = vperm.xlu0 %627, %v350
      %v629 = vpop.permute.xlu0 %628
      %632 = vset.pattern.permute.xlu0 0
      %633 = vperm.xlu0 %632, %v351
      %v634 = vpop.permute.xlu0 %633
      %637 = vset.pattern.permute.xlu0 0
      %638 = vperm.xlu0 %637, %v352
      %v639 = vpop.permute.xlu0 %638
      %642 = vset.pattern.permute.xlu0 0
      %643 = vperm.xlu0 %642, %v353
      %v644 = vpop.permute.xlu0 %643
      %647 = vset.pattern.permute.xlu0 0
      %648 = vperm.xlu0 %647, %v354
      %v649 = vpop.permute.xlu0 %648
      %652 = vset.pattern.permute.xlu0 0
      %653 = vperm.xlu0 %652, %v355
      %v654 = vpop.permute.xlu0 %653
      %657 = vset.pattern.permute.xlu0 0
      %658 = vperm.xlu0 %657, %v356
      %v659 = vpop.permute.xlu0 %658
      %662 = vset.pattern.permute.xlu0 0
      %663 = vperm.xlu0 %662, %v357
      %v664 = vpop.permute.xlu0 %663
      %667 = vset.pattern.permute.xlu0 0
      %668 = vperm.xlu0 %667, %v358
      %v669 = vpop.permute.xlu0 %668
      %672 = vset.pattern.permute.xlu0 0
      %673 = vperm.xlu0 %672, %v359
      %v674 = vpop.permute.xlu0 %673
      %677 = vset.pattern.permute.xlu0 0
      %678 = vperm.xlu0 %677, %v360
      %v679 = vpop.permute.xlu0 %678
      %682 = vset.pattern.permute.xlu0 0
      %683 = vperm.xlu0 %682, %v361
      %v684 = vpop.permute.xlu0 %683
      %687 = vset.pattern.permute.xlu0 0
      %688 = vperm.xlu0 %687, %v362
      %v689 = vpop.permute.xlu0 %688
      %692 = vset.pattern.permute.xlu0 0
      %693 = vperm.xlu0 %692, %v363
      %v694 = vpop.permute.xlu0 %693
      %v696 = vsub.f32 %v369, %v379
      %v697 = vsub.f32 %v373, %v379
      %v698 = vsub.f32 %v369, %v384
      %v699 = vsub.f32 %v373, %v384
      %v700 = vsub.f32 %v369, %v389
      %v701 = vsub.f32 %v373, %v389
      %v702 = vsub.f32 %v369, %v394
      %v703 = vsub.f32 %v373, %v394
      %v704 = vsub.f32 %v369, %v399
      %v705 = vsub.f32 %v373, %v399
      %v706 = vsub.f32 %v369, %v404
      %v707 = vsub.f32 %v373, %v404
      %v708 = vsub.f32 %v369, %v409
      %v709 = vsub.f32 %v373, %v409
      %v710 = vsub.f32 %v369, %v414
      %v711 = vsub.f32 %v373, %v414
      %v712 = vsub.f32 %v369, %v419
      %v713 = vsub.f32 %v373, %v419
      %v714 = vsub.f32 %v369, %v424
      %v715 = vsub.f32 %v373, %v424
      %v716 = vsub.f32 %v369, %v429
      %v717 = vsub.f32 %v373, %v429
      %v718 = vsub.f32 %v369, %v434
      %v719 = vsub.f32 %v373, %v434
      %v720 = vsub.f32 %v369, %v439
      %v721 = vsub.f32 %v373, %v439
      %v722 = vsub.f32 %v369, %v444
      %v723 = vsub.f32 %v373, %v444
      %v724 = vsub.f32 %v369, %v449
      %v725 = vsub.f32 %v373, %v449
      %v726 = vsub.f32 %v369, %v454
      %v727 = vsub.f32 %v373, %v454
      %v728 = vsub.f32 %v369, %v459
      %v729 = vsub.f32 %v373, %v459
      %v730 = vsub.f32 %v369, %v464
      %v731 = vsub.f32 %v373, %v464
      %v732 = vsub.f32 %v369, %v469
      %v733 = vsub.f32 %v373, %v469
      %v734 = vsub.f32 %v369, %v474
      %v735 = vsub.f32 %v373, %v474
      %v736 = vsub.f32 %v369, %v479
      %v737 = vsub.f32 %v373, %v479
      %v738 = vsub.f32 %v369, %v484
      %v739 = vsub.f32 %v373, %v484
      %v740 = vsub.f32 %v369, %v489
      %v741 = vsub.f32 %v373, %v489
      %v742 = vsub.f32 %v369, %v494
      %v743 = vsub.f32 %v373, %v494
      %v744 = vsub.f32 %v369, %v499
      %v745 = vsub.f32 %v373, %v499
      %v746 = vsub.f32 %v369, %v504
      %v747 = vsub.f32 %v373, %v504
      %v748 = vsub.f32 %v369, %v509
      %v749 = vsub.f32 %v373, %v509
      %v750 = vsub.f32 %v369, %v514
      %v751 = vsub.f32 %v373, %v514
      %v752 = vsub.f32 %v369, %v519
      %v753 = vsub.f32 %v373, %v519
      %v754 = vsub.f32 %v369, %v524
      %v755 = vsub.f32 %v373, %v524
      %v756 = vsub.f32 %v369, %v529
      %v757 = vsub.f32 %v373, %v529
      %v758 = vsub.f32 %v369, %v534
      %v759 = vsub.f32 %v373, %v534
      %v760 = vsub.f32 %v369, %v539
      %v761 = vsub.f32 %v373, %v539
      %v762 = vsub.f32 %v369, %v544
      %v763 = vsub.f32 %v373, %v544
      %v764 = vsub.f32 %v369, %v549
      %v765 = vsub.f32 %v373, %v549
      %v766 = vsub.f32 %v369, %v554
      %v767 = vsub.f32 %v373, %v554
      %v768 = vsub.f32 %v369, %v559
      %v769 = vsub.f32 %v373, %v559
      %v770 = vsub.f32 %v369, %v564
      %v771 = vsub.f32 %v373, %v564
      %v772 = vsub.f32 %v369, %v569
      %v773 = vsub.f32 %v373, %v569
      %v774 = vsub.f32 %v369, %v574
      %v775 = vsub.f32 %v373, %v574
      %v776 = vsub.f32 %v369, %v579
      %v777 = vsub.f32 %v373, %v579
      %v778 = vsub.f32 %v369, %v584
      %v779 = vsub.f32 %v373, %v584
      %v780 = vsub.f32 %v369, %v589
      %v781 = vsub.f32 %v373, %v589
      %v782 = vsub.f32 %v369, %v594
      %v783 = vsub.f32 %v373, %v594
      %v784 = vsub.f32 %v369, %v599
      %v785 = vsub.f32 %v373, %v599
      %v786 = vsub.f32 %v369, %v604
      %v787 = vsub.f32 %v373, %v604
      %v788 = vsub.f32 %v369, %v609
      %v789 = vsub.f32 %v373, %v609
      %v790 = vsub.f32 %v369, %v614
      %v791 = vsub.f32 %v373, %v614
      %v792 = vsub.f32 %v369, %v619
      %v793 = vsub.f32 %v373, %v619
      %v794 = vsub.f32 %v369, %v624
      %v795 = vsub.f32 %v373, %v624
      %v796 = vsub.f32 %v369, %v629
      %v797 = vsub.f32 %v373, %v629
      %v798 = vsub.f32 %v369, %v634
      %v799 = vsub.f32 %v373, %v634
      %v800 = vsub.f32 %v369, %v639
      %v801 = vsub.f32 %v373, %v639
      %v802 = vsub.f32 %v369, %v644
      %v803 = vsub.f32 %v373, %v644
      %v804 = vsub.f32 %v369, %v649
      %v805 = vsub.f32 %v373, %v649
      %v806 = vsub.f32 %v369, %v654
      %v807 = vsub.f32 %v373, %v654
      %v808 = vsub.f32 %v369, %v659
      %v809 = vsub.f32 %v373, %v659
      %v810 = vsub.f32 %v369, %v664
      %v811 = vsub.f32 %v373, %v664
      %v812 = vsub.f32 %v369, %v669
      %v813 = vsub.f32 %v373, %v669
      %v814 = vsub.f32 %v369, %v674
      %v815 = vsub.f32 %v373, %v674
      %v816 = vsub.f32 %v369, %v679
      %v817 = vsub.f32 %v373, %v679
      %v818 = vsub.f32 %v369, %v684
      %v819 = vsub.f32 %v373, %v684
      %v820 = vsub.f32 %v369, %v689
      %v821 = vsub.f32 %v373, %v689
      %v822 = vsub.f32 %v369, %v694
      %v823 = vsub.f32 %v373, %v694
      %v824 = vand.u32 2147483647, %v696
      %v825 = vand.u32 2147483647, %v697
      %v826 = vand.u32 2147483647, %v698
      %v827 = vand.u32 2147483647, %v699
      %v828 = vand.u32 2147483647, %v700
      %v829 = vand.u32 2147483647, %v701
      %v830 = vand.u32 2147483647, %v702
      %v831 = vand.u32 2147483647, %v703
      %v832 = vand.u32 2147483647, %v704
      %v833 = vand.u32 2147483647, %v705
      %v834 = vand.u32 2147483647, %v706
      %v835 = vand.u32 2147483647, %v707
      %v836 = vand.u32 2147483647, %v708
      %v837 = vand.u32 2147483647, %v709
      %v838 = vand.u32 2147483647, %v710
      %v839 = vand.u32 2147483647, %v711
      %v840 = vand.u32 2147483647, %v712
      %v841 = vand.u32 2147483647, %v713
      %v842 = vand.u32 2147483647, %v714
      %v843 = vand.u32 2147483647, %v715
      %v844 = vand.u32 2147483647, %v716
      %v845 = vand.u32 2147483647, %v717
      %v846 = vand.u32 2147483647, %v718
      %v847 = vand.u32 2147483647, %v719
      %v848 = vand.u32 2147483647, %v720
      %v849 = vand.u32 2147483647, %v721
      %v850 = vand.u32 2147483647, %v722
      %v851 = vand.u32 2147483647, %v723
      %v852 = vand.u32 2147483647, %v724
      %v853 = vand.u32 2147483647, %v725
      %v854 = vand.u32 2147483647, %v726
      %v855 = vand.u32 2147483647, %v727
      %v856 = vand.u32 2147483647, %v728
      %v857 = vand.u32 2147483647, %v729
      %v858 = vand.u32 2147483647, %v730
      %v859 = vand.u32 2147483647, %v731
      %v860 = vand.u32 2147483647, %v732
      %v861 = vand.u32 2147483647, %v733
      %v862 = vand.u32 2147483647, %v734
      %v863 = vand.u32 2147483647, %v735
      %v864 = vand.u32 2147483647, %v736
      %v865 = vand.u32 2147483647, %v737
      %v866 = vand.u32 2147483647, %v738
      %v867 = vand.u32 2147483647, %v739
      %v868 = vand.u32 2147483647, %v740
      %v869 = vand.u32 2147483647, %v741
      %v870 = vand.u32 2147483647, %v742
      %v871 = vand.u32 2147483647, %v743
      %v872 = vand.u32 2147483647, %v744
      %v873 = vand.u32 2147483647, %v745
      %v874 = vand.u32 2147483647, %v746
      %v875 = vand.u32 2147483647, %v747
      %v876 = vand.u32 2147483647, %v748
      %v877 = vand.u32 2147483647, %v749
      %v878 = vand.u32 2147483647, %v750
      %v879 = vand.u32 2147483647, %v751
      %v880 = vand.u32 2147483647, %v752
      %v881 = vand.u32 2147483647, %v753
      %v882 = vand.u32 2147483647, %v754
      %v883 = vand.u32 2147483647, %v755
      %v884 = vand.u32 2147483647, %v756
      %v885 = vand.u32 2147483647, %v757
      %v886 = vand.u32 2147483647, %v758
      %v887 = vand.u32 2147483647, %v759
      %v888 = vand.u32 2147483647, %v760
      %v889 = vand.u32 2147483647, %v761
      %v890 = vand.u32 2147483647, %v762
      %v891 = vand.u32 2147483647, %v763
      %v892 = vand.u32 2147483647, %v764
      %v893 = vand.u32 2147483647, %v765
      %v894 = vand.u32 2147483647, %v766
      %v895 = vand.u32 2147483647, %v767
      %v896 = vand.u32 2147483647, %v768
      %v897 = vand.u32 2147483647, %v769
      %v898 = vand.u32 2147483647, %v770
      %v899 = vand.u32 2147483647, %v771
      %v900 = vand.u32 2147483647, %v772
      %v901 = vand.u32 2147483647, %v773
      %v902 = vand.u32 2147483647, %v774
      %v903 = vand.u32 2147483647, %v775
      %v904 = vand.u32 2147483647, %v776
      %v905 = vand.u32 2147483647, %v777
      %v906 = vand.u32 2147483647, %v778
      %v907 = vand.u32 2147483647, %v779
      %v908 = vand.u32 2147483647, %v780
      %v909 = vand.u32 2147483647, %v781
      %v910 = vand.u32 2147483647, %v782
      %v911 = vand.u32 2147483647, %v783
      %v912 = vand.u32 2147483647, %v784
      %v913 = vand.u32 2147483647, %v785
      %v914 = vand.u32 2147483647, %v786
      %v915 = vand.u32 2147483647, %v787
      %v916 = vand.u32 2147483647, %v788
      %v917 = vand.u32 2147483647, %v789
      %v918 = vand.u32 2147483647, %v790
      %v919 = vand.u32 2147483647, %v791
      %v920 = vand.u32 2147483647, %v792
      %v921 = vand.u32 2147483647, %v793
      %v922 = vand.u32 2147483647, %v794
      %v923 = vand.u32 2147483647, %v795
      %v924 = vand.u32 2147483647, %v796
      %v925 = vand.u32 2147483647, %v797
      %v926 = vand.u32 2147483647, %v798
      %v927 = vand.u32 2147483647, %v799
      %v928 = vand.u32 2147483647, %v800
      %v929 = vand.u32 2147483647, %v801
      %v930 = vand.u32 2147483647, %v802
      %v931 = vand.u32 2147483647, %v803
      %v932 = vand.u32 2147483647, %v804
      %v933 = vand.u32 2147483647, %v805
      %v934 = vand.u32 2147483647, %v806
      %v935 = vand.u32 2147483647, %v807
      %v936 = vand.u32 2147483647, %v808
      %v937 = vand.u32 2147483647, %v809
      %v938 = vand.u32 2147483647, %v810
      %v939 = vand.u32 2147483647, %v811
      %v940 = vand.u32 2147483647, %v812
      %v941 = vand.u32 2147483647, %v813
      %v942 = vand.u32 2147483647, %v814
      %v943 = vand.u32 2147483647, %v815
      %v944 = vand.u32 2147483647, %v816
      %v945 = vand.u32 2147483647, %v817
      %v946 = vand.u32 2147483647, %v818
      %v947 = vand.u32 2147483647, %v819
      %v948 = vand.u32 2147483647, %v820
      %v949 = vand.u32 2147483647, %v821
      %v950 = vand.u32 2147483647, %v822
      %v951 = vand.u32 2147483647, %v823
      %v952 = vsub.f32 1.0, %v824
      %v953 = vsub.f32 1.0, %v825
      %v954 = vsub.f32 1.0, %v826
      %v955 = vsub.f32 1.0, %v827
      %v956 = vsub.f32 1.0, %v828
      %v957 = vsub.f32 1.0, %v829
      %v958 = vsub.f32 1.0, %v830
      %v959 = vsub.f32 1.0, %v831
      %v960 = vsub.f32 1.0, %v832
      %v961 = vsub.f32 1.0, %v833
      %v962 = vsub.f32 1.0, %v834
      %v963 = vsub.f32 1.0, %v835
      %v964 = vsub.f32 1.0, %v836
      %v965 = vsub.f32 1.0, %v837
      %v966 = vsub.f32 1.0, %v838
      %v967 = vsub.f32 1.0, %v839
      %v968 = vsub.f32 1.0, %v840
      %v969 = vsub.f32 1.0, %v841
      %v970 = vsub.f32 1.0, %v842
      %v971 = vsub.f32 1.0, %v843
      %v972 = vsub.f32 1.0, %v844
      %v973 = vsub.f32 1.0, %v845
      %v974 = vsub.f32 1.0, %v846
      %v975 = vsub.f32 1.0, %v847
      %v976 = vsub.f32 1.0, %v848
      %v977 = vsub.f32 1.0, %v849
      %v978 = vsub.f32 1.0, %v850
      %v979 = vsub.f32 1.0, %v851
      %v980 = vsub.f32 1.0, %v852
      %v981 = vsub.f32 1.0, %v853
      %v982 = vsub.f32 1.0, %v854
      %v983 = vsub.f32 1.0, %v855
      %v984 = vsub.f32 1.0, %v856
      %v985 = vsub.f32 1.0, %v857
      %v986 = vsub.f32 1.0, %v858
      %v987 = vsub.f32 1.0, %v859
      %v988 = vsub.f32 1.0, %v860
      %v989 = vsub.f32 1.0, %v861
      %v990 = vsub.f32 1.0, %v862
      %v991 = vsub.f32 1.0, %v863
      %v992 = vsub.f32 1.0, %v864
      %v993 = vsub.f32 1.0, %v865
      %v994 = vsub.f32 1.0, %v866
      %v995 = vsub.f32 1.0, %v867
      %v996 = vsub.f32 1.0, %v868
      %v997 = vsub.f32 1.0, %v869
      %v998 = vsub.f32 1.0, %v870
      %v999 = vsub.f32 1.0, %v871
      %v1000 = vsub.f32 1.0, %v872
      %v1001 = vsub.f32 1.0, %v873
      %v1002 = vsub.f32 1.0, %v874
      %v1003 = vsub.f32 1.0, %v875
      %v1004 = vsub.f32 1.0, %v876
      %v1005 = vsub.f32 1.0, %v877
      %v1006 = vsub.f32 1.0, %v878
      %v1007 = vsub.f32 1.0, %v879
      %v1008 = vsub.f32 1.0, %v880
      %v1009 = vsub.f32 1.0, %v881
      %v1010 = vsub.f32 1.0, %v882
      %v1011 = vsub.f32 1.0, %v883
      %v1012 = vsub.f32 1.0, %v884
      %v1013 = vsub.f32 1.0, %v885
      %v1014 = vsub.f32 1.0, %v886
      %v1015 = vsub.f32 1.0, %v887
      %v1016 = vsub.f32 1.0, %v888
      %v1017 = vsub.f32 1.0, %v889
      %v1018 = vsub.f32 1.0, %v890
      %v1019 = vsub.f32 1.0, %v891
      %v1020 = vsub.f32 1.0, %v892
      %v1021 = vsub.f32 1.0, %v893
      %v1022 = vsub.f32 1.0, %v894
      %v1023 = vsub.f32 1.0, %v895
      %v1024 = vsub.f32 1.0, %v896
      %v1025 = vsub.f32 1.0, %v897
      %v1026 = vsub.f32 1.0, %v898
      %v1027 = vsub.f32 1.0, %v899
      %v1028 = vsub.f32 1.0, %v900
      %v1029 = vsub.f32 1.0, %v901
      %v1030 = vsub.f32 1.0, %v902
      %v1031 = vsub.f32 1.0, %v903
      %v1032 = vsub.f32 1.0, %v904
      %v1033 = vsub.f32 1.0, %v905
      %v1034 = vsub.f32 1.0, %v906
      %v1035 = vsub.f32 1.0, %v907
      %v1036 = vsub.f32 1.0, %v908
      %v1037 = vsub.f32 1.0, %v909
      %v1038 = vsub.f32 1.0, %v910
      %v1039 = vsub.f32 1.0, %v911
      %v1040 = vsub.f32 1.0, %v912
      %v1041 = vsub.f32 1.0, %v913
      %v1042 = vsub.f32 1.0, %v914
      %v1043 = vsub.f32 1.0, %v915
      %v1044 = vsub.f32 1.0, %v916
      %v1045 = vsub.f32 1.0, %v917
      %v1046 = vsub.f32 1.0, %v918
      %v1047 = vsub.f32 1.0, %v919
      %v1048 = vsub.f32 1.0, %v920
      %v1049 = vsub.f32 1.0, %v921
      %v1050 = vsub.f32 1.0, %v922
      %v1051 = vsub.f32 1.0, %v923
      %v1052 = vsub.f32 1.0, %v924
      %v1053 = vsub.f32 1.0, %v925
      %v1054 = vsub.f32 1.0, %v926
      %v1055 = vsub.f32 1.0, %v927
      %v1056 = vsub.f32 1.0, %v928
      %v1057 = vsub.f32 1.0, %v929
      %v1058 = vsub.f32 1.0, %v930
      %v1059 = vsub.f32 1.0, %v931
      %v1060 = vsub.f32 1.0, %v932
      %v1061 = vsub.f32 1.0, %v933
      %v1062 = vsub.f32 1.0, %v934
      %v1063 = vsub.f32 1.0, %v935
      %v1064 = vsub.f32 1.0, %v936
      %v1065 = vsub.f32 1.0, %v937
      %v1066 = vsub.f32 1.0, %v938
      %v1067 = vsub.f32 1.0, %v939
      %v1068 = vsub.f32 1.0, %v940
      %v1069 = vsub.f32 1.0, %v941
      %v1070 = vsub.f32 1.0, %v942
      %v1071 = vsub.f32 1.0, %v943
      %v1072 = vsub.f32 1.0, %v944
      %v1073 = vsub.f32 1.0, %v945
      %v1074 = vsub.f32 1.0, %v946
      %v1075 = vsub.f32 1.0, %v947
      %v1076 = vsub.f32 1.0, %v948
      %v1077 = vsub.f32 1.0, %v949
      %v1078 = vsub.f32 1.0, %v950
      %v1079 = vsub.f32 1.0, %v951
      %v1080 = vmax.f32 %v952, 0.0
      %v1081 = vmax.f32 %v953, 0.0
      %v1082 = vmax.f32 %v954, 0.0
      %v1083 = vmax.f32 %v955, 0.0
      %v1084 = vmax.f32 %v956, 0.0
      %v1085 = vmax.f32 %v957, 0.0
      %v1086 = vmax.f32 %v958, 0.0
      %v1087 = vmax.f32 %v959, 0.0
      %v1088 = vmax.f32 %v960, 0.0
      %v1089 = vmax.f32 %v961, 0.0
      %v1090 = vmax.f32 %v962, 0.0
      %v1091 = vmax.f32 %v963, 0.0
      %v1092 = vmax.f32 %v964, 0.0
      %v1093 = vmax.f32 %v965, 0.0
      %v1094 = vmax.f32 %v966, 0.0
      %v1095 = vmax.f32 %v967, 0.0
      %v1096 = vmax.f32 %v968, 0.0
      %v1097 = vmax.f32 %v969, 0.0
      %v1098 = vmax.f32 %v970, 0.0
      %v1099 = vmax.f32 %v971, 0.0
      %v1100 = vmax.f32 %v972, 0.0
      %v1101 = vmax.f32 %v973, 0.0
      %v1102 = vmax.f32 %v974, 0.0
      %v1103 = vmax.f32 %v975, 0.0
      %v1104 = vmax.f32 %v976, 0.0
      %v1105 = vmax.f32 %v977, 0.0
      %v1106 = vmax.f32 %v978, 0.0
      %v1107 = vmax.f32 %v979, 0.0
      %v1108 = vmax.f32 %v980, 0.0
      %v1109 = vmax.f32 %v981, 0.0
      %v1110 = vmax.f32 %v982, 0.0
      %v1111 = vmax.f32 %v983, 0.0
      %v1112 = vmax.f32 %v984, 0.0
      %v1113 = vmax.f32 %v985, 0.0
      %v1114 = vmax.f32 %v986, 0.0
      %v1115 = vmax.f32 %v987, 0.0
      %v1116 = vmax.f32 %v988, 0.0
      %v1117 = vmax.f32 %v989, 0.0
      %v1118 = vmax.f32 %v990, 0.0
      %v1119 = vmax.f32 %v991, 0.0
      %v1120 = vmax.f32 %v992, 0.0
      %v1121 = vmax.f32 %v993, 0.0
      %v1122 = vmax.f32 %v994, 0.0
      %v1123 = vmax.f32 %v995, 0.0
      %v1124 = vmax.f32 %v996, 0.0
      %v1125 = vmax.f32 %v997, 0.0
      %v1126 = vmax.f32 %v998, 0.0
      %v1127 = vmax.f32 %v999, 0.0
      %v1128 = vmax.f32 %v1000, 0.0
      %v1129 = vmax.f32 %v1001, 0.0
      %v1130 = vmax.f32 %v1002, 0.0
      %v1131 = vmax.f32 %v1003, 0.0
      %v1132 = vmax.f32 %v1004, 0.0
      %v1133 = vmax.f32 %v1005, 0.0
      %v1134 = vmax.f32 %v1006, 0.0
      %v1135 = vmax.f32 %v1007, 0.0
      %v1136 = vmax.f32 %v1008, 0.0
      %v1137 = vmax.f32 %v1009, 0.0
      %v1138 = vmax.f32 %v1010, 0.0
      %v1139 = vmax.f32 %v1011, 0.0
      %v1140 = vmax.f32 %v1012, 0.0
      %v1141 = vmax.f32 %v1013, 0.0
      %v1142 = vmax.f32 %v1014, 0.0
      %v1143 = vmax.f32 %v1015, 0.0
      %v1144 = vmax.f32 %v1016, 0.0
      %v1145 = vmax.f32 %v1017, 0.0
      %v1146 = vmax.f32 %v1018, 0.0
      %v1147 = vmax.f32 %v1019, 0.0
      %v1148 = vmax.f32 %v1020, 0.0
      %v1149 = vmax.f32 %v1021, 0.0
      %v1150 = vmax.f32 %v1022, 0.0
      %v1151 = vmax.f32 %v1023, 0.0
      %v1152 = vmax.f32 %v1024, 0.0
      %v1153 = vmax.f32 %v1025, 0.0
      %v1154 = vmax.f32 %v1026, 0.0
      %v1155 = vmax.f32 %v1027, 0.0
      %v1156 = vmax.f32 %v1028, 0.0
      %v1157 = vmax.f32 %v1029, 0.0
      %v1158 = vmax.f32 %v1030, 0.0
      %v1159 = vmax.f32 %v1031, 0.0
      %v1160 = vmax.f32 %v1032, 0.0
      %v1161 = vmax.f32 %v1033, 0.0
      %v1162 = vmax.f32 %v1034, 0.0
      %v1163 = vmax.f32 %v1035, 0.0
      %v1164 = vmax.f32 %v1036, 0.0
      %v1165 = vmax.f32 %v1037, 0.0
      %v1166 = vmax.f32 %v1038, 0.0
      %v1167 = vmax.f32 %v1039, 0.0
      %v1168 = vmax.f32 %v1040, 0.0
      %v1169 = vmax.f32 %v1041, 0.0
      %v1170 = vmax.f32 %v1042, 0.0
      %v1171 = vmax.f32 %v1043, 0.0
      %v1172 = vmax.f32 %v1044, 0.0
      %v1173 = vmax.f32 %v1045, 0.0
      %v1174 = vmax.f32 %v1046, 0.0
      %v1175 = vmax.f32 %v1047, 0.0
      %v1176 = vmax.f32 %v1048, 0.0
      %v1177 = vmax.f32 %v1049, 0.0
      %v1178 = vmax.f32 %v1050, 0.0
      %v1179 = vmax.f32 %v1051, 0.0
      %v1180 = vmax.f32 %v1052, 0.0
      %v1181 = vmax.f32 %v1053, 0.0
      %v1182 = vmax.f32 %v1054, 0.0
      %v1183 = vmax.f32 %v1055, 0.0
      %v1184 = vmax.f32 %v1056, 0.0
      %v1185 = vmax.f32 %v1057, 0.0
      %v1186 = vmax.f32 %v1058, 0.0
      %v1187 = vmax.f32 %v1059, 0.0
      %v1188 = vmax.f32 %v1060, 0.0
      %v1189 = vmax.f32 %v1061, 0.0
      %v1190 = vmax.f32 %v1062, 0.0
      %v1191 = vmax.f32 %v1063, 0.0
      %v1192 = vmax.f32 %v1064, 0.0
      %v1193 = vmax.f32 %v1065, 0.0
      %v1194 = vmax.f32 %v1066, 0.0
      %v1195 = vmax.f32 %v1067, 0.0
      %v1196 = vmax.f32 %v1068, 0.0
      %v1197 = vmax.f32 %v1069, 0.0
      %v1198 = vmax.f32 %v1070, 0.0
      %v1199 = vmax.f32 %v1071, 0.0
      %v1200 = vmax.f32 %v1072, 0.0
      %v1201 = vmax.f32 %v1073, 0.0
      %v1202 = vmax.f32 %v1074, 0.0
      %v1203 = vmax.f32 %v1075, 0.0
      %v1204 = vmax.f32 %v1076, 0.0
      %v1205 = vmax.f32 %v1077, 0.0
      %v1206 = vmax.f32 %v1078, 0.0
      %v1207 = vmax.f32 %v1079, 0.0
      %v1208 = vld [vmem:[%s2] sm:$0x3]
      %v1210 = vlaneseq
      %v1211 = vshrl.u32 %v1210, 7
      %v1212 = vsub.s32 0, %v1211
      %v1213 = vrot.slane %v1208, %v1212
      %v1214 = vlaneseq
      %v1215 = vshrl.u32 %v1214, 7
      %v1216 = vsub.s32 1, %v1215
      %v1217 = vrot.slane %v1208, %v1216
      %1220 = vset.pattern.permute.xlu0 1
      %1221 = vperm.xlu0 %1220, %v300
      %v1222 = vpop.permute.xlu0 %1221
      %1224 = vset.pattern.permute.xlu0 1
      %1225 = vperm.xlu0 %1224, %v301
      %v1226 = vpop.permute.xlu0 %1225
      %1228 = vset.pattern.permute.xlu0 1
      %1229 = vperm.xlu0 %1228, %v302
      %v1230 = vpop.permute.xlu0 %1229
      %1232 = vset.pattern.permute.xlu0 1
      %1233 = vperm.xlu0 %1232, %v303
      %v1234 = vpop.permute.xlu0 %1233
      %1236 = vset.pattern.permute.xlu0 1
      %1237 = vperm.xlu0 %1236, %v304
      %v1238 = vpop.permute.xlu0 %1237
      %1240 = vset.pattern.permute.xlu0 1
      %1241 = vperm.xlu0 %1240, %v305
      %v1242 = vpop.permute.xlu0 %1241
      %1244 = vset.pattern.permute.xlu0 1
      %1245 = vperm.xlu0 %1244, %v306
      %v1246 = vpop.permute.xlu0 %1245
      %1248 = vset.pattern.permute.xlu0 1
      %1249 = vperm.xlu0 %1248, %v307
      %v1250 = vpop.permute.xlu0 %1249
      %1252 = vset.pattern.permute.xlu0 1
      %1253 = vperm.xlu0 %1252, %v308
      %v1254 = vpop.permute.xlu0 %1253
      %1256 = vset.pattern.permute.xlu0 1
      %1257 = vperm.xlu0 %1256, %v309
      %v1258 = vpop.permute.xlu0 %1257
      %1260 = vset.pattern.permute.xlu0 1
      %1261 = vperm.xlu0 %1260, %v310
      %v1262 = vpop.permute.xlu0 %1261
      %1264 = vset.pattern.permute.xlu0 1
      %1265 = vperm.xlu0 %1264, %v311
      %v1266 = vpop.permute.xlu0 %1265
      %1268 = vset.pattern.permute.xlu0 1
      %1269 = vperm.xlu0 %1268, %v312
      %v1270 = vpop.permute.xlu0 %1269
      %1272 = vset.pattern.permute.xlu0 1
      %1273 = vperm.xlu0 %1272, %v313
      %v1274 = vpop.permute.xlu0 %1273
      %1276 = vset.pattern.permute.xlu0 1
      %1277 = vperm.xlu0 %1276, %v314
      %v1278 = vpop.permute.xlu0 %1277
      %1280 = vset.pattern.permute.xlu0 1
      %1281 = vperm.xlu0 %1280, %v315
      %v1282 = vpop.permute.xlu0 %1281
      %1284 = vset.pattern.permute.xlu0 1
      %1285 = vperm.xlu0 %1284, %v316
      %v1286 = vpop.permute.xlu0 %1285
      %1288 = vset.pattern.permute.xlu0 1
      %1289 = vperm.xlu0 %1288, %v317
      %v1290 = vpop.permute.xlu0 %1289
      %1292 = vset.pattern.permute.xlu0 1
      %1293 = vperm.xlu0 %1292, %v318
      %v1294 = vpop.permute.xlu0 %1293
      %1296 = vset.pattern.permute.xlu0 1
      %1297 = vperm.xlu0 %1296, %v319
      %v1298 = vpop.permute.xlu0 %1297
      %1300 = vset.pattern.permute.xlu0 1
      %1301 = vperm.xlu0 %1300, %v320
      %v1302 = vpop.permute.xlu0 %1301
      %1304 = vset.pattern.permute.xlu0 1
      %1305 = vperm.xlu0 %1304, %v321
      %v1306 = vpop.permute.xlu0 %1305
      %1308 = vset.pattern.permute.xlu0 1
      %1309 = vperm.xlu0 %1308, %v322
      %v1310 = vpop.permute.xlu0 %1309
      %1312 = vset.pattern.permute.xlu0 1
      %1313 = vperm.xlu0 %1312, %v323
      %v1314 = vpop.permute.xlu0 %1313
      %1316 = vset.pattern.permute.xlu0 1
      %1317 = vperm.xlu0 %1316, %v324
      %v1318 = vpop.permute.xlu0 %1317
      %1320 = vset.pattern.permute.xlu0 1
      %1321 = vperm.xlu0 %1320, %v325
      %v1322 = vpop.permute.xlu0 %1321
      %1324 = vset.pattern.permute.xlu0 1
      %1325 = vperm.xlu0 %1324, %v326
      %v1326 = vpop.permute.xlu0 %1325
      %1328 = vset.pattern.permute.xlu0 1
      %1329 = vperm.xlu0 %1328, %v327
      %v1330 = vpop.permute.xlu0 %1329
      %1332 = vset.pattern.permute.xlu0 1
      %1333 = vperm.xlu0 %1332, %v328
      %v1334 = vpop.permute.xlu0 %1333
      %1336 = vset.pattern.permute.xlu0 1
      %1337 = vperm.xlu0 %1336, %v329
      %v1338 = vpop.permute.xlu0 %1337
      %1340 = vset.pattern.permute.xlu0 1
      %1341 = vperm.xlu0 %1340, %v330
      %v1342 = vpop.permute.xlu0 %1341
      %1344 = vset.pattern.permute.xlu0 1
      %1345 = vperm.xlu0 %1344, %v331
      %v1346 = vpop.permute.xlu0 %1345
      %1348 = vset.pattern.permute.xlu0 1
      %1349 = vperm.xlu0 %1348, %v332
      %v1350 = vpop.permute.xlu0 %1349
      %1352 = vset.pattern.permute.xlu0 1
      %1353 = vperm.xlu0 %1352, %v333
      %v1354 = vpop.permute.xlu0 %1353
      %1356 = vset.pattern.permute.xlu0 1
      %1357 = vperm.xlu0 %1356, %v334
      %v1358 = vpop.permute.xlu0 %1357
      %1360 = vset.pattern.permute.xlu0 1
      %1361 = vperm.xlu0 %1360, %v335
      %v1362 = vpop.permute.xlu0 %1361
      %1364 = vset.pattern.permute.xlu0 1
      %1365 = vperm.xlu0 %1364, %v336
      %v1366 = vpop.permute.xlu0 %1365
      %1368 = vset.pattern.permute.xlu0 1
      %1369 = vperm.xlu0 %1368, %v337
      %v1370 = vpop.permute.xlu0 %1369
      %1372 = vset.pattern.permute.xlu0 1
      %1373 = vperm.xlu0 %1372, %v338
      %v1374 = vpop.permute.xlu0 %1373
      %1376 = vset.pattern.permute.xlu0 1
      %1377 = vperm.xlu0 %1376, %v339
      %v1378 = vpop.permute.xlu0 %1377
      %1380 = vset.pattern.permute.xlu0 1
      %1381 = vperm.xlu0 %1380, %v340
      %v1382 = vpop.permute.xlu0 %1381
      %1384 = vset.pattern.permute.xlu0 1
      %1385 = vperm.xlu0 %1384, %v341
      %v1386 = vpop.permute.xlu0 %1385
      %1388 = vset.pattern.permute.xlu0 1
      %1389 = vperm.xlu0 %1388, %v342
      %v1390 = vpop.permute.xlu0 %1389
      %1392 = vset.pattern.permute.xlu0 1
      %1393 = vperm.xlu0 %1392, %v343
      %v1394 = vpop.permute.xlu0 %1393
      %1396 = vset.pattern.permute.xlu0 1
      %1397 = vperm.xlu0 %1396, %v344
      %v1398 = vpop.permute.xlu0 %1397
      %1400 = vset.pattern.permute.xlu0 1
      %1401 = vperm.xlu0 %1400, %v345
      %v1402 = vpop.permute.xlu0 %1401
      %1404 = vset.pattern.permute.xlu0 1
      %1405 = vperm.xlu0 %1404, %v346
      %v1406 = vpop.permute.xlu0 %1405
      %1408 = vset.pattern.permute.xlu0 1
      %1409 = vperm.xlu0 %1408, %v347
      %v1410 = vpop.permute.xlu0 %1409
      %1412 = vset.pattern.permute.xlu0 1
      %1413 = vperm.xlu0 %1412, %v348
      %v1414 = vpop.permute.xlu0 %1413
      %1416 = vset.pattern.permute.xlu0 1
      %1417 = vperm.xlu0 %1416, %v349
      %v1418 = vpop.permute.xlu0 %1417
      %1420 = vset.pattern.permute.xlu0 1
      %1421 = vperm.xlu0 %1420, %v350
      %v1422 = vpop.permute.xlu0 %1421
      %1424 = vset.pattern.permute.xlu0 1
      %1425 = vperm.xlu0 %1424, %v351
      %v1426 = vpop.permute.xlu0 %1425
      %1428 = vset.pattern.permute.xlu0 1
      %1429 = vperm.xlu0 %1428, %v352
      %v1430 = vpop.permute.xlu0 %1429
      %1432 = vset.pattern.permute.xlu0 1
      %1433 = vperm.xlu0 %1432, %v353
      %v1434 = vpop.permute.xlu0 %1433
      %1436 = vset.pattern.permute.xlu0 1
      %1437 = vperm.xlu0 %1436, %v354
      %v1438 = vpop.permute.xlu0 %1437
      %1440 = vset.pattern.permute.xlu0 1
      %1441 = vperm.xlu0 %1440, %v355
      %v1442 = vpop.permute.xlu0 %1441
      %1444 = vset.pattern.permute.xlu0 1
      %1445 = vperm.xlu0 %1444, %v356
      %v1446 = vpop.permute.xlu0 %1445
      %1448 = vset.pattern.permute.xlu0 1
      %1449 = vperm.xlu0 %1448, %v357
      %v1450 = vpop.permute.xlu0 %1449
      %1452 = vset.pattern.permute.xlu0 1
      %1453 = vperm.xlu0 %1452, %v358
      %v1454 = vpop.permute.xlu0 %1453
      %1456 = vset.pattern.permute.xlu0 1
      %1457 = vperm.xlu0 %1456, %v359
      %v1458 = vpop.permute.xlu0 %1457
      %1460 = vset.pattern.permute.xlu0 1
      %1461 = vperm.xlu0 %1460, %v360
      %v1462 = vpop.permute.xlu0 %1461
      %1464 = vset.pattern.permute.xlu0 1
      %1465 = vperm.xlu0 %1464, %v361
      %v1466 = vpop.permute.xlu0 %1465
      %1468 = vset.pattern.permute.xlu0 1
      %1469 = vperm.xlu0 %1468, %v362
      %v1470 = vpop.permute.xlu0 %1469
      %1472 = vset.pattern.permute.xlu0 1
      %1473 = vperm.xlu0 %1472, %v363
      %v1474 = vpop.permute.xlu0 %1473
      %v1476 = vsub.f32 %v1213, %v1222
      %v1477 = vsub.f32 %v1217, %v1222
      %v1478 = vsub.f32 %v1213, %v1226
      %v1479 = vsub.f32 %v1217, %v1226
      %v1480 = vsub.f32 %v1213, %v1230
      %v1481 = vsub.f32 %v1217, %v1230
      %v1482 = vsub.f32 %v1213, %v1234
      %v1483 = vsub.f32 %v1217, %v1234
      %v1484 = vsub.f32 %v1213, %v1238
      %v1485 = vsub.f32 %v1217, %v1238
      %v1486 = vsub.f32 %v1213, %v1242
      %v1487 = vsub.f32 %v1217, %v1242
      %v1488 = vsub.f32 %v1213, %v1246
      %v1489 = vsub.f32 %v1217, %v1246
      %v1490 = vsub.f32 %v1213, %v1250
      %v1491 = vsub.f32 %v1217, %v1250
      %v1492 = vsub.f32 %v1213, %v1254
      %v1493 = vsub.f32 %v1217, %v1254
      %v1494 = vsub.f32 %v1213, %v1258
      %v1495 = vsub.f32 %v1217, %v1258
      %v1496 = vsub.f32 %v1213, %v1262
      %v1497 = vsub.f32 %v1217, %v1262
      %v1498 = vsub.f32 %v1213, %v1266
      %v1499 = vsub.f32 %v1217, %v1266
      %v1500 = vsub.f32 %v1213, %v1270
      %v1501 = vsub.f32 %v1217, %v1270
      %v1502 = vsub.f32 %v1213, %v1274
      %v1503 = vsub.f32 %v1217, %v1274
      %v1504 = vsub.f32 %v1213, %v1278
      %v1505 = vsub.f32 %v1217, %v1278
      %v1506 = vsub.f32 %v1213, %v1282
      %v1507 = vsub.f32 %v1217, %v1282
      %v1508 = vsub.f32 %v1213, %v1286
      %v1509 = vsub.f32 %v1217, %v1286
      %v1510 = vsub.f32 %v1213, %v1290
      %v1511 = vsub.f32 %v1217, %v1290
      %v1512 = vsub.f32 %v1213, %v1294
      %v1513 = vsub.f32 %v1217, %v1294
      %v1514 = vsub.f32 %v1213, %v1298
      %v1515 = vsub.f32 %v1217, %v1298
      %v1516 = vsub.f32 %v1213, %v1302
      %v1517 = vsub.f32 %v1217, %v1302
      %v1518 = vsub.f32 %v1213, %v1306
      %v1519 = vsub.f32 %v1217, %v1306
      %v1520 = vsub.f32 %v1213, %v1310
      %v1521 = vsub.f32 %v1217, %v1310
      %v1522 = vsub.f32 %v1213, %v1314
      %v1523 = vsub.f32 %v1217, %v1314
      %v1524 = vsub.f32 %v1213, %v1318
      %v1525 = vsub.f32 %v1217, %v1318
      %v1526 = vsub.f32 %v1213, %v1322
      %v1527 = vsub.f32 %v1217, %v1322
      %v1528 = vsub.f32 %v1213, %v1326
      %v1529 = vsub.f32 %v1217, %v1326
      %v1530 = vsub.f32 %v1213, %v1330
      %v1531 = vsub.f32 %v1217, %v1330
      %v1532 = vsub.f32 %v1213, %v1334
      %v1533 = vsub.f32 %v1217, %v1334
      %v1534 = vsub.f32 %v1213, %v1338
      %v1535 = vsub.f32 %v1217, %v1338
      %v1536 = vsub.f32 %v1213, %v1342
      %v1537 = vsub.f32 %v1217, %v1342
      %v1538 = vsub.f32 %v1213, %v1346
      %v1539 = vsub.f32 %v1217, %v1346
      %v1540 = vsub.f32 %v1213, %v1350
      %v1541 = vsub.f32 %v1217, %v1350
      %v1542 = vsub.f32 %v1213, %v1354
      %v1543 = vsub.f32 %v1217, %v1354
      %v1544 = vsub.f32 %v1213, %v1358
      %v1545 = vsub.f32 %v1217, %v1358
      %v1546 = vsub.f32 %v1213, %v1362
      %v1547 = vsub.f32 %v1217, %v1362
      %v1548 = vsub.f32 %v1213, %v1366
      %v1549 = vsub.f32 %v1217, %v1366
      %v1550 = vsub.f32 %v1213, %v1370
      %v1551 = vsub.f32 %v1217, %v1370
      %v1552 = vsub.f32 %v1213, %v1374
      %v1553 = vsub.f32 %v1217, %v1374
      %v1554 = vsub.f32 %v1213, %v1378
      %v1555 = vsub.f32 %v1217, %v1378
      %v1556 = vsub.f32 %v1213, %v1382
      %v1557 = vsub.f32 %v1217, %v1382
      %v1558 = vsub.f32 %v1213, %v1386
      %v1559 = vsub.f32 %v1217, %v1386
      %v1560 = vsub.f32 %v1213, %v1390
      %v1561 = vsub.f32 %v1217, %v1390
      %v1562 = vsub.f32 %v1213, %v1394
      %v1563 = vsub.f32 %v1217, %v1394
      %v1564 = vsub.f32 %v1213, %v1398
      %v1565 = vsub.f32 %v1217, %v1398
      %v1566 = vsub.f32 %v1213, %v1402
      %v1567 = vsub.f32 %v1217, %v1402
      %v1568 = vsub.f32 %v1213, %v1406
      %v1569 = vsub.f32 %v1217, %v1406
      %v1570 = vsub.f32 %v1213, %v1410
      %v1571 = vsub.f32 %v1217, %v1410
      %v1572 = vsub.f32 %v1213, %v1414
      %v1573 = vsub.f32 %v1217, %v1414
      %v1574 = vsub.f32 %v1213, %v1418
      %v1575 = vsub.f32 %v1217, %v1418
      %v1576 = vsub.f32 %v1213, %v1422
      %v1577 = vsub.f32 %v1217, %v1422
      %v1578 = vsub.f32 %v1213, %v1426
      %v1579 = vsub.f32 %v1217, %v1426
      %v1580 = vsub.f32 %v1213, %v1430
      %v1581 = vsub.f32 %v1217, %v1430
      %v1582 = vsub.f32 %v1213, %v1434
      %v1583 = vsub.f32 %v1217, %v1434
      %v1584 = vsub.f32 %v1213, %v1438
      %v1585 = vsub.f32 %v1217, %v1438
      %v1586 = vsub.f32 %v1213, %v1442
      %v1587 = vsub.f32 %v1217, %v1442
      %v1588 = vsub.f32 %v1213, %v1446
      %v1589 = vsub.f32 %v1217, %v1446
      %v1590 = vsub.f32 %v1213, %v1450
      %v1591 = vsub.f32 %v1217, %v1450
      %v1592 = vsub.f32 %v1213, %v1454
      %v1593 = vsub.f32 %v1217, %v1454
      %v1594 = vsub.f32 %v1213, %v1458
      %v1595 = vsub.f32 %v1217, %v1458
      %v1596 = vsub.f32 %v1213, %v1462
      %v1597 = vsub.f32 %v1217, %v1462
      %v1598 = vsub.f32 %v1213, %v1466
      %v1599 = vsub.f32 %v1217, %v1466
      %v1600 = vsub.f32 %v1213, %v1470
      %v1601 = vsub.f32 %v1217, %v1470
      %v1602 = vsub.f32 %v1213, %v1474
      %v1603 = vsub.f32 %v1217, %v1474
      %v1604 = vand.u32 2147483647, %v1476
      %v1605 = vand.u32 2147483647, %v1477
      %v1606 = vand.u32 2147483647, %v1478
      %v1607 = vand.u32 2147483647, %v1479
      %v1608 = vand.u32 2147483647, %v1480
      %v1609 = vand.u32 2147483647, %v1481
      %v1610 = vand.u32 2147483647, %v1482
      %v1611 = vand.u32 2147483647, %v1483
      %v1612 = vand.u32 2147483647, %v1484
      %v1613 = vand.u32 2147483647, %v1485
      %v1614 = vand.u32 2147483647, %v1486
      %v1615 = vand.u32 2147483647, %v1487
      %v1616 = vand.u32 2147483647, %v1488
      %v1617 = vand.u32 2147483647, %v1489
      %v1618 = vand.u32 2147483647, %v1490
      %v1619 = vand.u32 2147483647, %v1491
      %v1620 = vand.u32 2147483647, %v1492
      %v1621 = vand.u32 2147483647, %v1493
      %v1622 = vand.u32 2147483647, %v1494
      %v1623 = vand.u32 2147483647, %v1495
      %v1624 = vand.u32 2147483647, %v1496
      %v1625 = vand.u32 2147483647, %v1497
      %v1626 = vand.u32 2147483647, %v1498
      %v1627 = vand.u32 2147483647, %v1499
      %v1628 = vand.u32 2147483647, %v1500
      %v1629 = vand.u32 2147483647, %v1501
      %v1630 = vand.u32 2147483647, %v1502
      %v1631 = vand.u32 2147483647, %v1503
      %v1632 = vand.u32 2147483647, %v1504
      %v1633 = vand.u32 2147483647, %v1505
      %v1634 = vand.u32 2147483647, %v1506
      %v1635 = vand.u32 2147483647, %v1507
      %v1636 = vand.u32 2147483647, %v1508
      %v1637 = vand.u32 2147483647, %v1509
      %v1638 = vand.u32 2147483647, %v1510
      %v1639 = vand.u32 2147483647, %v1511
      %v1640 = vand.u32 2147483647, %v1512
      %v1641 = vand.u32 2147483647, %v1513
      %v1642 = vand.u32 2147483647, %v1514
      %v1643 = vand.u32 2147483647, %v1515
      %v1644 = vand.u32 2147483647, %v1516
      %v1645 = vand.u32 2147483647, %v1517
      %v1646 = vand.u32 2147483647, %v1518
      %v1647 = vand.u32 2147483647, %v1519
      %v1648 = vand.u32 2147483647, %v1520
      %v1649 = vand.u32 2147483647, %v1521
      %v1650 = vand.u32 2147483647, %v1522
      %v1651 = vand.u32 2147483647, %v1523
      %v1652 = vand.u32 2147483647, %v1524
      %v1653 = vand.u32 2147483647, %v1525
      %v1654 = vand.u32 2147483647, %v1526
      %v1655 = vand.u32 2147483647, %v1527
      %v1656 = vand.u32 2147483647, %v1528
      %v1657 = vand.u32 2147483647, %v1529
      %v1658 = vand.u32 2147483647, %v1530
      %v1659 = vand.u32 2147483647, %v1531
      %v1660 = vand.u32 2147483647, %v1532
      %v1661 = vand.u32 2147483647, %v1533
      %v1662 = vand.u32 2147483647, %v1534
      %v1663 = vand.u32 2147483647, %v1535
      %v1664 = vand.u32 2147483647, %v1536
      %v1665 = vand.u32 2147483647, %v1537
      %v1666 = vand.u32 2147483647, %v1538
      %v1667 = vand.u32 2147483647, %v1539
      %v1668 = vand.u32 2147483647, %v1540
      %v1669 = vand.u32 2147483647, %v1541
      %v1670 = vand.u32 2147483647, %v1542
      %v1671 = vand.u32 2147483647, %v1543
      %v1672 = vand.u32 2147483647, %v1544
      %v1673 = vand.u32 2147483647, %v1545
      %v1674 = vand.u32 2147483647, %v1546
      %v1675 = vand.u32 2147483647, %v1547
      %v1676 = vand.u32 2147483647, %v1548
      %v1677 = vand.u32 2147483647, %v1549
      %v1678 = vand.u32 2147483647, %v1550
      %v1679 = vand.u32 2147483647, %v1551
      %v1680 = vand.u32 2147483647, %v1552
      %v1681 = vand.u32 2147483647, %v1553
      %v1682 = vand.u32 2147483647, %v1554
      %v1683 = vand.u32 2147483647, %v1555
      %v1684 = vand.u32 2147483647, %v1556
      %v1685 = vand.u32 2147483647, %v1557
      %v1686 = vand.u32 2147483647, %v1558
      %v1687 = vand.u32 2147483647, %v1559
      %v1688 = vand.u32 2147483647, %v1560
      %v1689 = vand.u32 2147483647, %v1561
      %v1690 = vand.u32 2147483647, %v1562
      %v1691 = vand.u32 2147483647, %v1563
      %v1692 = vand.u32 2147483647, %v1564
      %v1693 = vand.u32 2147483647, %v1565
      %v1694 = vand.u32 2147483647, %v1566
      %v1695 = vand.u32 2147483647, %v1567
      %v1696 = vand.u32 2147483647, %v1568
      %v1697 = vand.u32 2147483647, %v1569
      %v1698 = vand.u32 2147483647, %v1570
      %v1699 = vand.u32 2147483647, %v1571
      %v1700 = vand.u32 2147483647, %v1572
      %v1701 = vand.u32 2147483647, %v1573
      %v1702 = vand.u32 2147483647, %v1574
      %v1703 = vand.u32 2147483647, %v1575
      %v1704 = vand.u32 2147483647, %v1576
      %v1705 = vand.u32 2147483647, %v1577
      %v1706 = vand.u32 2147483647, %v1578
      %v1707 = vand.u32 2147483647, %v1579
      %v1708 = vand.u32 2147483647, %v1580
      %v1709 = vand.u32 2147483647, %v1581
      %v1710 = vand.u32 2147483647, %v1582
      %v1711 = vand.u32 2147483647, %v1583
      %v1712 = vand.u32 2147483647, %v1584
      %v1713 = vand.u32 2147483647, %v1585
      %v1714 = vand.u32 2147483647, %v1586
      %v1715 = vand.u32 2147483647, %v1587
      %v1716 = vand.u32 2147483647, %v1588
      %v1717 = vand.u32 2147483647, %v1589
      %v1718 = vand.u32 2147483647, %v1590
      %v1719 = vand.u32 2147483647, %v1591
      %v1720 = vand.u32 2147483647, %v1592
      %v1721 = vand.u32 2147483647, %v1593
      %v1722 = vand.u32 2147483647, %v1594
      %v1723 = vand.u32 2147483647, %v1595
      %v1724 = vand.u32 2147483647, %v1596
      %v1725 = vand.u32 2147483647, %v1597
      %v1726 = vand.u32 2147483647, %v1598
      %v1727 = vand.u32 2147483647, %v1599
      %v1728 = vand.u32 2147483647, %v1600
      %v1729 = vand.u32 2147483647, %v1601
      %v1730 = vand.u32 2147483647, %v1602
      %v1731 = vand.u32 2147483647, %v1603
      %v1732 = vsub.f32 1.0, %v1604
      %v1733 = vsub.f32 1.0, %v1605
      %v1734 = vsub.f32 1.0, %v1606
      %v1735 = vsub.f32 1.0, %v1607
      %v1736 = vsub.f32 1.0, %v1608
      %v1737 = vsub.f32 1.0, %v1609
      %v1738 = vsub.f32 1.0, %v1610
      %v1739 = vsub.f32 1.0, %v1611
      %v1740 = vsub.f32 1.0, %v1612
      %v1741 = vsub.f32 1.0, %v1613
      %v1742 = vsub.f32 1.0, %v1614
      %v1743 = vsub.f32 1.0, %v1615
      %v1744 = vsub.f32 1.0, %v1616
      %v1745 = vsub.f32 1.0, %v1617
      %v1746 = vsub.f32 1.0, %v1618
      %v1747 = vsub.f32 1.0, %v1619
      %v1748 = vsub.f32 1.0, %v1620
      %v1749 = vsub.f32 1.0, %v1621
      %v1750 = vsub.f32 1.0, %v1622
      %v1751 = vsub.f32 1.0, %v1623
      %v1752 = vsub.f32 1.0, %v1624
      %v1753 = vsub.f32 1.0, %v1625
      %v1754 = vsub.f32 1.0, %v1626
      %v1755 = vsub.f32 1.0, %v1627
      %v1756 = vsub.f32 1.0, %v1628
      %v1757 = vsub.f32 1.0, %v1629
      %v1758 = vsub.f32 1.0, %v1630
      %v1759 = vsub.f32 1.0, %v1631
      %v1760 = vsub.f32 1.0, %v1632
      %v1761 = vsub.f32 1.0, %v1633
      %v1762 = vsub.f32 1.0, %v1634
      %v1763 = vsub.f32 1.0, %v1635
      %v1764 = vsub.f32 1.0, %v1636
      %v1765 = vsub.f32 1.0, %v1637
      %v1766 = vsub.f32 1.0, %v1638
      %v1767 = vsub.f32 1.0, %v1639
      %v1768 = vsub.f32 1.0, %v1640
      %v1769 = vsub.f32 1.0, %v1641
      %v1770 = vsub.f32 1.0, %v1642
      %v1771 = vsub.f32 1.0, %v1643
      %v1772 = vsub.f32 1.0, %v1644
      %v1773 = vsub.f32 1.0, %v1645
      %v1774 = vsub.f32 1.0, %v1646
      %v1775 = vsub.f32 1.0, %v1647
      %v1776 = vsub.f32 1.0, %v1648
      %v1777 = vsub.f32 1.0, %v1649
      %v1778 = vsub.f32 1.0, %v1650
      %v1779 = vsub.f32 1.0, %v1651
      %v1780 = vsub.f32 1.0, %v1652
      %v1781 = vsub.f32 1.0, %v1653
      %v1782 = vsub.f32 1.0, %v1654
      %v1783 = vsub.f32 1.0, %v1655
      %v1784 = vsub.f32 1.0, %v1656
      %v1785 = vsub.f32 1.0, %v1657
      %v1786 = vsub.f32 1.0, %v1658
      %v1787 = vsub.f32 1.0, %v1659
      %v1788 = vsub.f32 1.0, %v1660
      %v1789 = vsub.f32 1.0, %v1661
      %v1790 = vsub.f32 1.0, %v1662
      %v1791 = vsub.f32 1.0, %v1663
      %v1792 = vsub.f32 1.0, %v1664
      %v1793 = vsub.f32 1.0, %v1665
      %v1794 = vsub.f32 1.0, %v1666
      %v1795 = vsub.f32 1.0, %v1667
      %v1796 = vsub.f32 1.0, %v1668
      %v1797 = vsub.f32 1.0, %v1669
      %v1798 = vsub.f32 1.0, %v1670
      %v1799 = vsub.f32 1.0, %v1671
      %v1800 = vsub.f32 1.0, %v1672
      %v1801 = vsub.f32 1.0, %v1673
      %v1802 = vsub.f32 1.0, %v1674
      %v1803 = vsub.f32 1.0, %v1675
      %v1804 = vsub.f32 1.0, %v1676
      %v1805 = vsub.f32 1.0, %v1677
      %v1806 = vsub.f32 1.0, %v1678
      %v1807 = vsub.f32 1.0, %v1679
      %v1808 = vsub.f32 1.0, %v1680
      %v1809 = vsub.f32 1.0, %v1681
      %v1810 = vsub.f32 1.0, %v1682
      %v1811 = vsub.f32 1.0, %v1683
      %v1812 = vsub.f32 1.0, %v1684
      %v1813 = vsub.f32 1.0, %v1685
      %v1814 = vsub.f32 1.0, %v1686
      %v1815 = vsub.f32 1.0, %v1687
      %v1816 = vsub.f32 1.0, %v1688
      %v1817 = vsub.f32 1.0, %v1689
      %v1818 = vsub.f32 1.0, %v1690
      %v1819 = vsub.f32 1.0, %v1691
      %v1820 = vsub.f32 1.0, %v1692
      %v1821 = vsub.f32 1.0, %v1693
      %v1822 = vsub.f32 1.0, %v1694
      %v1823 = vsub.f32 1.0, %v1695
      %v1824 = vsub.f32 1.0, %v1696
      %v1825 = vsub.f32 1.0, %v1697
      %v1826 = vsub.f32 1.0, %v1698
      %v1827 = vsub.f32 1.0, %v1699
      %v1828 = vsub.f32 1.0, %v1700
      %v1829 = vsub.f32 1.0, %v1701
      %v1830 = vsub.f32 1.0, %v1702
      %v1831 = vsub.f32 1.0, %v1703
      %v1832 = vsub.f32 1.0, %v1704
      %v1833 = vsub.f32 1.0, %v1705
      %v1834 = vsub.f32 1.0, %v1706
      %v1835 = vsub.f32 1.0, %v1707
      %v1836 = vsub.f32 1.0, %v1708
      %v1837 = vsub.f32 1.0, %v1709
      %v1838 = vsub.f32 1.0, %v1710
      %v1839 = vsub.f32 1.0, %v1711
      %v1840 = vsub.f32 1.0, %v1712
      %v1841 = vsub.f32 1.0, %v1713
      %v1842 = vsub.f32 1.0, %v1714
      %v1843 = vsub.f32 1.0, %v1715
      %v1844 = vsub.f32 1.0, %v1716
      %v1845 = vsub.f32 1.0, %v1717
      %v1846 = vsub.f32 1.0, %v1718
      %v1847 = vsub.f32 1.0, %v1719
      %v1848 = vsub.f32 1.0, %v1720
      %v1849 = vsub.f32 1.0, %v1721
      %v1850 = vsub.f32 1.0, %v1722
      %v1851 = vsub.f32 1.0, %v1723
      %v1852 = vsub.f32 1.0, %v1724
      %v1853 = vsub.f32 1.0, %v1725
      %v1854 = vsub.f32 1.0, %v1726
      %v1855 = vsub.f32 1.0, %v1727
      %v1856 = vsub.f32 1.0, %v1728
      %v1857 = vsub.f32 1.0, %v1729
      %v1858 = vsub.f32 1.0, %v1730
      %v1859 = vsub.f32 1.0, %v1731
      %v1860 = vmax.f32 %v1732, 0.0
      %v1861 = vmax.f32 %v1733, 0.0
      %v1862 = vmax.f32 %v1734, 0.0
      %v1863 = vmax.f32 %v1735, 0.0
      %v1864 = vmax.f32 %v1736, 0.0
      %v1865 = vmax.f32 %v1737, 0.0
      %v1866 = vmax.f32 %v1738, 0.0
      %v1867 = vmax.f32 %v1739, 0.0
      %v1868 = vmax.f32 %v1740, 0.0
      %v1869 = vmax.f32 %v1741, 0.0
      %v1870 = vmax.f32 %v1742, 0.0
      %v1871 = vmax.f32 %v1743, 0.0
      %v1872 = vmax.f32 %v1744, 0.0
      %v1873 = vmax.f32 %v1745, 0.0
      %v1874 = vmax.f32 %v1746, 0.0
      %v1875 = vmax.f32 %v1747, 0.0
      %v1876 = vmax.f32 %v1748, 0.0
      %v1877 = vmax.f32 %v1749, 0.0
      %v1878 = vmax.f32 %v1750, 0.0
      %v1879 = vmax.f32 %v1751, 0.0
      %v1880 = vmax.f32 %v1752, 0.0
      %v1881 = vmax.f32 %v1753, 0.0
      %v1882 = vmax.f32 %v1754, 0.0
      %v1883 = vmax.f32 %v1755, 0.0
      %v1884 = vmax.f32 %v1756, 0.0
      %v1885 = vmax.f32 %v1757, 0.0
      %v1886 = vmax.f32 %v1758, 0.0
      %v1887 = vmax.f32 %v1759, 0.0
      %v1888 = vmax.f32 %v1760, 0.0
      %v1889 = vmax.f32 %v1761, 0.0
      %v1890 = vmax.f32 %v1762, 0.0
      %v1891 = vmax.f32 %v1763, 0.0
      %v1892 = vmax.f32 %v1764, 0.0
      %v1893 = vmax.f32 %v1765, 0.0
      %v1894 = vmax.f32 %v1766, 0.0
      %v1895 = vmax.f32 %v1767, 0.0
      %v1896 = vmax.f32 %v1768, 0.0
      %v1897 = vmax.f32 %v1769, 0.0
      %v1898 = vmax.f32 %v1770, 0.0
      %v1899 = vmax.f32 %v1771, 0.0
      %v1900 = vmax.f32 %v1772, 0.0
      %v1901 = vmax.f32 %v1773, 0.0
      %v1902 = vmax.f32 %v1774, 0.0
      %v1903 = vmax.f32 %v1775, 0.0
      %v1904 = vmax.f32 %v1776, 0.0
      %v1905 = vmax.f32 %v1777, 0.0
      %v1906 = vmax.f32 %v1778, 0.0
      %v1907 = vmax.f32 %v1779, 0.0
      %v1908 = vmax.f32 %v1780, 0.0
      %v1909 = vmax.f32 %v1781, 0.0
      %v1910 = vmax.f32 %v1782, 0.0
      %v1911 = vmax.f32 %v1783, 0.0
      %v1912 = vmax.f32 %v1784, 0.0
      %v1913 = vmax.f32 %v1785, 0.0
      %v1914 = vmax.f32 %v1786, 0.0
      %v1915 = vmax.f32 %v1787, 0.0
      %v1916 = vmax.f32 %v1788, 0.0
      %v1917 = vmax.f32 %v1789, 0.0
      %v1918 = vmax.f32 %v1790, 0.0
      %v1919 = vmax.f32 %v1791, 0.0
      %v1920 = vmax.f32 %v1792, 0.0
      %v1921 = vmax.f32 %v1793, 0.0
      %v1922 = vmax.f32 %v1794, 0.0
      %v1923 = vmax.f32 %v1795, 0.0
      %v1924 = vmax.f32 %v1796, 0.0
      %v1925 = vmax.f32 %v1797, 0.0
      %v1926 = vmax.f32 %v1798, 0.0
      %v1927 = vmax.f32 %v1799, 0.0
      %v1928 = vmax.f32 %v1800, 0.0
      %v1929 = vmax.f32 %v1801, 0.0
      %v1930 = vmax.f32 %v1802, 0.0
      %v1931 = vmax.f32 %v1803, 0.0
      %v1932 = vmax.f32 %v1804, 0.0
      %v1933 = vmax.f32 %v1805, 0.0
      %v1934 = vmax.f32 %v1806, 0.0
      %v1935 = vmax.f32 %v1807, 0.0
      %v1936 = vmax.f32 %v1808, 0.0
      %v1937 = vmax.f32 %v1809, 0.0
      %v1938 = vmax.f32 %v1810, 0.0
      %v1939 = vmax.f32 %v1811, 0.0
      %v1940 = vmax.f32 %v1812, 0.0
      %v1941 = vmax.f32 %v1813, 0.0
      %v1942 = vmax.f32 %v1814, 0.0
      %v1943 = vmax.f32 %v1815, 0.0
      %v1944 = vmax.f32 %v1816, 0.0
      %v1945 = vmax.f32 %v1817, 0.0
      %v1946 = vmax.f32 %v1818, 0.0
      %v1947 = vmax.f32 %v1819, 0.0
      %v1948 = vmax.f32 %v1820, 0.0
      %v1949 = vmax.f32 %v1821, 0.0
      %v1950 = vmax.f32 %v1822, 0.0
      %v1951 = vmax.f32 %v1823, 0.0
      %v1952 = vmax.f32 %v1824, 0.0
      %v1953 = vmax.f32 %v1825, 0.0
      %v1954 = vmax.f32 %v1826, 0.0
      %v1955 = vmax.f32 %v1827, 0.0
      %v1956 = vmax.f32 %v1828, 0.0
      %v1957 = vmax.f32 %v1829, 0.0
      %v1958 = vmax.f32 %v1830, 0.0
      %v1959 = vmax.f32 %v1831, 0.0
      %v1960 = vmax.f32 %v1832, 0.0
      %v1961 = vmax.f32 %v1833, 0.0
      %v1962 = vmax.f32 %v1834, 0.0
      %v1963 = vmax.f32 %v1835, 0.0
      %v1964 = vmax.f32 %v1836, 0.0
      %v1965 = vmax.f32 %v1837, 0.0
      %v1966 = vmax.f32 %v1838, 0.0
      %v1967 = vmax.f32 %v1839, 0.0
      %v1968 = vmax.f32 %v1840, 0.0
      %v1969 = vmax.f32 %v1841, 0.0
      %v1970 = vmax.f32 %v1842, 0.0
      %v1971 = vmax.f32 %v1843, 0.0
      %v1972 = vmax.f32 %v1844, 0.0
      %v1973 = vmax.f32 %v1845, 0.0
      %v1974 = vmax.f32 %v1846, 0.0
      %v1975 = vmax.f32 %v1847, 0.0
      %v1976 = vmax.f32 %v1848, 0.0
      %v1977 = vmax.f32 %v1849, 0.0
      %v1978 = vmax.f32 %v1850, 0.0
      %v1979 = vmax.f32 %v1851, 0.0
      %v1980 = vmax.f32 %v1852, 0.0
      %v1981 = vmax.f32 %v1853, 0.0
      %v1982 = vmax.f32 %v1854, 0.0
      %v1983 = vmax.f32 %v1855, 0.0
      %v1984 = vmax.f32 %v1856, 0.0
      %v1985 = vmax.f32 %v1857, 0.0
      %v1986 = vmax.f32 %v1858, 0.0
      %v1987 = vmax.f32 %v1859, 0.0
      %v1988 = vmul.f32 %v1080, %v1860
      %v1989 = vmul.f32 %v1081, %v1861
      %v1990 = vmul.f32 %v1082, %v1862
      %v1991 = vmul.f32 %v1083, %v1863
      %v1992 = vmul.f32 %v1084, %v1864
      %v1993 = vmul.f32 %v1085, %v1865
      %v1994 = vmul.f32 %v1086, %v1866
      %v1995 = vmul.f32 %v1087, %v1867
      %v1996 = vmul.f32 %v1088, %v1868
      %v1997 = vmul.f32 %v1089, %v1869
      %v1998 = vmul.f32 %v1090, %v1870
      %v1999 = vmul.f32 %v1091, %v1871
      %v2000 = vmul.f32 %v1092, %v1872
      %v2001 = vmul.f32 %v1093, %v1873
      %v2002 = vmul.f32 %v1094, %v1874
      %v2003 = vmul.f32 %v1095, %v1875
      %v2004 = vmul.f32 %v1096, %v1876
      %v2005 = vmul.f32 %v1097, %v1877
      %v2006 = vmul.f32 %v1098, %v1878
      %v2007 = vmul.f32 %v1099, %v1879
      %v2008 = vmul.f32 %v1100, %v1880
      %v2009 = vmul.f32 %v1101, %v1881
      %v2010 = vmul.f32 %v1102, %v1882
      %v2011 = vmul.f32 %v1103, %v1883
      %v2012 = vmul.f32 %v1104, %v1884
      %v2013 = vmul.f32 %v1105, %v1885
      %v2014 = vmul.f32 %v1106, %v1886
      %v2015 = vmul.f32 %v1107, %v1887
      %v2016 = vmul.f32 %v1108, %v1888
      %v2017 = vmul.f32 %v1109, %v1889
      %v2018 = vmul.f32 %v1110, %v1890
      %v2019 = vmul.f32 %v1111, %v1891
      %v2020 = vmul.f32 %v1112, %v1892
      %v2021 = vmul.f32 %v1113, %v1893
      %v2022 = vmul.f32 %v1114, %v1894
      %v2023 = vmul.f32 %v1115, %v1895
      %v2024 = vmul.f32 %v1116, %v1896
      %v2025 = vmul.f32 %v1117, %v1897
      %v2026 = vmul.f32 %v1118, %v1898
      %v2027 = vmul.f32 %v1119, %v1899
      %v2028 = vmul.f32 %v1120, %v1900
      %v2029 = vmul.f32 %v1121, %v1901
      %v2030 = vmul.f32 %v1122, %v1902
      %v2031 = vmul.f32 %v1123, %v1903
      %v2032 = vmul.f32 %v1124, %v1904
      %v2033 = vmul.f32 %v1125, %v1905
      %v2034 = vmul.f32 %v1126, %v1906
      %v2035 = vmul.f32 %v1127, %v1907
      %v2036 = vmul.f32 %v1128, %v1908
      %v2037 = vmul.f32 %v1129, %v1909
      %v2038 = vmul.f32 %v1130, %v1910
      %v2039 = vmul.f32 %v1131, %v1911
      %v2040 = vmul.f32 %v1132, %v1912
      %v2041 = vmul.f32 %v1133, %v1913
      %v2042 = vmul.f32 %v1134, %v1914
      %v2043 = vmul.f32 %v1135, %v1915
      %v2044 = vmul.f32 %v1136, %v1916
      %v2045 = vmul.f32 %v1137, %v1917
      %v2046 = vmul.f32 %v1138, %v1918
      %v2047 = vmul.f32 %v1139, %v1919
      %v2048 = vmul.f32 %v1140, %v1920
      %v2049 = vmul.f32 %v1141, %v1921
      %v2050 = vmul.f32 %v1142, %v1922
      %v2051 = vmul.f32 %v1143, %v1923
      %v2052 = vmul.f32 %v1144, %v1924
      %v2053 = vmul.f32 %v1145, %v1925
      %v2054 = vmul.f32 %v1146, %v1926
      %v2055 = vmul.f32 %v1147, %v1927
      %v2056 = vmul.f32 %v1148, %v1928
      %v2057 = vmul.f32 %v1149, %v1929
      %v2058 = vmul.f32 %v1150, %v1930
      %v2059 = vmul.f32 %v1151, %v1931
      %v2060 = vmul.f32 %v1152, %v1932
      %v2061 = vmul.f32 %v1153, %v1933
      %v2062 = vmul.f32 %v1154, %v1934
      %v2063 = vmul.f32 %v1155, %v1935
      %v2064 = vmul.f32 %v1156, %v1936
      %v2065 = vmul.f32 %v1157, %v1937
      %v2066 = vmul.f32 %v1158, %v1938
      %v2067 = vmul.f32 %v1159, %v1939
      %v2068 = vmul.f32 %v1160, %v1940
      %v2069 = vmul.f32 %v1161, %v1941
      %v2070 = vmul.f32 %v1162, %v1942
      %v2071 = vmul.f32 %v1163, %v1943
      %v2072 = vmul.f32 %v1164, %v1944
      %v2073 = vmul.f32 %v1165, %v1945
      %v2074 = vmul.f32 %v1166, %v1946
      %v2075 = vmul.f32 %v1167, %v1947
      %v2076 = vmul.f32 %v1168, %v1948
      %v2077 = vmul.f32 %v1169, %v1949
      %v2078 = vmul.f32 %v1170, %v1950
      %v2079 = vmul.f32 %v1171, %v1951
      %v2080 = vmul.f32 %v1172, %v1952
      %v2081 = vmul.f32 %v1173, %v1953
      %v2082 = vmul.f32 %v1174, %v1954
      %v2083 = vmul.f32 %v1175, %v1955
      %v2084 = vmul.f32 %v1176, %v1956
      %v2085 = vmul.f32 %v1177, %v1957
      %v2086 = vmul.f32 %v1178, %v1958
      %v2087 = vmul.f32 %v1179, %v1959
      %v2088 = vmul.f32 %v1180, %v1960
      %v2089 = vmul.f32 %v1181, %v1961
      %v2090 = vmul.f32 %v1182, %v1962
      %v2091 = vmul.f32 %v1183, %v1963
      %v2092 = vmul.f32 %v1184, %v1964
      %v2093 = vmul.f32 %v1185, %v1965
      %v2094 = vmul.f32 %v1186, %v1966
      %v2095 = vmul.f32 %v1187, %v1967
      %v2096 = vmul.f32 %v1188, %v1968
      %v2097 = vmul.f32 %v1189, %v1969
      %v2098 = vmul.f32 %v1190, %v1970
      %v2099 = vmul.f32 %v1191, %v1971
      %v2100 = vmul.f32 %v1192, %v1972
      %v2101 = vmul.f32 %v1193, %v1973
      %v2102 = vmul.f32 %v1194, %v1974
      %v2103 = vmul.f32 %v1195, %v1975
      %v2104 = vmul.f32 %v1196, %v1976
      %v2105 = vmul.f32 %v1197, %v1977
      %v2106 = vmul.f32 %v1198, %v1978
      %v2107 = vmul.f32 %v1199, %v1979
      %v2108 = vmul.f32 %v1200, %v1980
      %v2109 = vmul.f32 %v1201, %v1981
      %v2110 = vmul.f32 %v1202, %v1982
      %v2111 = vmul.f32 %v1203, %v1983
      %v2112 = vmul.f32 %v1204, %v1984
      %v2113 = vmul.f32 %v1205, %v1985
      %v2114 = vmul.f32 %v1206, %v1986
      %v2115 = vmul.f32 %v1207, %v1987
      %v2116 = vpack.c.bf16 %v1990, %v1988
      %v2117 = vpack.c.bf16 %v1991, %v1989
      %v2118 = vpack.c.bf16 %v1994, %v1992
      %v2119 = vpack.c.bf16 %v1995, %v1993
      %v2120 = vpack.c.bf16 %v1998, %v1996
      %v2121 = vpack.c.bf16 %v1999, %v1997
      %v2122 = vpack.c.bf16 %v2002, %v2000
      %v2123 = vpack.c.bf16 %v2003, %v2001
      %v2124 = vpack.c.bf16 %v2006, %v2004
      %v2125 = vpack.c.bf16 %v2007, %v2005
      %v2126 = vpack.c.bf16 %v2010, %v2008
      %v2127 = vpack.c.bf16 %v2011, %v2009
      %v2128 = vpack.c.bf16 %v2014, %v2012
      %v2129 = vpack.c.bf16 %v2015, %v2013
      %v2130 = vpack.c.bf16 %v2018, %v2016
      %v2131 = vpack.c.bf16 %v2019, %v2017
      %v2132 = vpack.c.bf16 %v2022, %v2020
      %v2133 = vpack.c.bf16 %v2023, %v2021
      %v2134 = vpack.c.bf16 %v2026, %v2024
      %v2135 = vpack.c.bf16 %v2027, %v2025
      %v2136 = vpack.c.bf16 %v2030, %v2028
      %v2137 = vpack.c.bf16 %v2031, %v2029
      %v2138 = vpack.c.bf16 %v2034, %v2032
      %v2139 = vpack.c.bf16 %v2035, %v2033
      %v2140 = vpack.c.bf16 %v2038, %v2036
      %v2141 = vpack.c.bf16 %v2039, %v2037
      %v2142 = vpack.c.bf16 %v2042, %v2040
      %v2143 = vpack.c.bf16 %v2043, %v2041
      %v2144 = vpack.c.bf16 %v2046, %v2044
      %v2145 = vpack.c.bf16 %v2047, %v2045
      %v2146 = vpack.c.bf16 %v2050, %v2048
      %v2147 = vpack.c.bf16 %v2051, %v2049
      %v2148 = vpack.c.bf16 %v2054, %v2052
      %v2149 = vpack.c.bf16 %v2055, %v2053
      %v2150 = vpack.c.bf16 %v2058, %v2056
      %v2151 = vpack.c.bf16 %v2059, %v2057
      %v2152 = vpack.c.bf16 %v2062, %v2060
      %v2153 = vpack.c.bf16 %v2063, %v2061
      %v2154 = vpack.c.bf16 %v2066, %v2064
      %v2155 = vpack.c.bf16 %v2067, %v2065
      %v2156 = vpack.c.bf16 %v2070, %v2068
      %v2157 = vpack.c.bf16 %v2071, %v2069
      %v2158 = vpack.c.bf16 %v2074, %v2072
      %v2159 = vpack.c.bf16 %v2075, %v2073
      %v2160 = vpack.c.bf16 %v2078, %v2076
      %v2161 = vpack.c.bf16 %v2079, %v2077
      %v2162 = vpack.c.bf16 %v2082, %v2080
      %v2163 = vpack.c.bf16 %v2083, %v2081
      %v2164 = vpack.c.bf16 %v2086, %v2084
      %v2165 = vpack.c.bf16 %v2087, %v2085
      %v2166 = vpack.c.bf16 %v2090, %v2088
      %v2167 = vpack.c.bf16 %v2091, %v2089
      %v2168 = vpack.c.bf16 %v2094, %v2092
      %v2169 = vpack.c.bf16 %v2095, %v2093
      %v2170 = vpack.c.bf16 %v2098, %v2096
      %v2171 = vpack.c.bf16 %v2099, %v2097
      %v2172 = vpack.c.bf16 %v2102, %v2100
      %v2173 = vpack.c.bf16 %v2103, %v2101
      %v2174 = vpack.c.bf16 %v2106, %v2104
      %v2175 = vpack.c.bf16 %v2107, %v2105
      %v2176 = vpack.c.bf16 %v2110, %v2108
      %v2177 = vpack.c.bf16 %v2111, %v2109
      %v2178 = vpack.c.bf16 %v2114, %v2112
      %v2179 = vpack.c.bf16 %v2115, %v2113
      %v2180 = vld [vmem:[%s227] sm:$0xf]
      %v2181 = vld [vmem:[%s227 + $0x4] sm:$0xf]
      %v2182 = vld [vmem:[%s227 + $0x8] sm:$0xf]
      %v2183 = vld [vmem:[%s227 + $0xc] sm:$0xf]
      %v2184 = vld [vmem:[%s227 + $0x10] sm:$0xf]
      %v2185 = vld [vmem:[%s227 + $0x14] sm:$0xf]
      %v2186 = vld [vmem:[%s227 + $0x18] sm:$0xf]
      %v2187 = vld [vmem:[%s227 + $0x1c] sm:$0xf]
      %v2188 = vld [vmem:[%s227 + $0x20] sm:$0xf]
      %v2189 = vld [vmem:[%s227 + $0x24] sm:$0xf]
      %v2190 = vld [vmem:[%s227 + $0x28] sm:$0xf]
      %v2191 = vld [vmem:[%s227 + $0x2c] sm:$0xf]
      %v2192 = vld [vmem:[%s227 + $0x30] sm:$0xf]
      %v2193 = vld [vmem:[%s227 + $0x34] sm:$0xf]
      %v2194 = vld [vmem:[%s227 + $0x38] sm:$0xf]
      %v2195 = vld [vmem:[%s227 + $0x3c] sm:$0xf]
      %v2196 = vld [vmem:[%s227 + $0x40] sm:$0xf]
      %v2197 = vld [vmem:[%s227 + $0x44] sm:$0xf]
      %v2198 = vld [vmem:[%s227 + $0x48] sm:$0xf]
      %v2199 = vld [vmem:[%s227 + $0x4c] sm:$0xf]
      %v2200 = vld [vmem:[%s227 + $0x50] sm:$0xf]
      %v2201 = vld [vmem:[%s227 + $0x54] sm:$0xf]
      %v2202 = vld [vmem:[%s227 + $0x58] sm:$0xf]
      %v2203 = vld [vmem:[%s227 + $0x5c] sm:$0xf]
      %v2204 = vld [vmem:[%s227 + $0x60] sm:$0xf]
      %v2205 = vld [vmem:[%s227 + $0x64] sm:$0xf]
      %v2206 = vld [vmem:[%s227 + $0x68] sm:$0xf]
      %v2207 = vld [vmem:[%s227 + $0x6c] sm:$0xf]
      %v2208 = vld [vmem:[%s227 + $0x70] sm:$0xf]
      %v2209 = vld [vmem:[%s227 + $0x74] sm:$0xf]
      %v2210 = vld [vmem:[%s227 + $0x78] sm:$0xf]
      %v2211 = vld [vmem:[%s227 + $0x7c] sm:$0xf]
      %v2244 = vunpack.c.l.b16 %v2180
      %v2245 = vunpack.c.l.b16 %v2181
      %v2246 = vunpack.c.l.b16 %v2182
      %v2247 = vunpack.c.l.b16 %v2183
      %v2248 = vunpack.c.l.b16 %v2184
      %v2249 = vunpack.c.l.b16 %v2185
      %v2250 = vunpack.c.l.b16 %v2186
      %v2251 = vunpack.c.l.b16 %v2187
      %v2252 = vunpack.c.l.b16 %v2188
      %v2253 = vunpack.c.l.b16 %v2189
      %v2254 = vunpack.c.l.b16 %v2190
      %v2255 = vunpack.c.l.b16 %v2191
      %v2256 = vunpack.c.l.b16 %v2192
      %v2257 = vunpack.c.l.b16 %v2193
      %v2258 = vunpack.c.l.b16 %v2194
      %v2259 = vunpack.c.l.b16 %v2195
      %v2260 = vunpack.c.l.b16 %v2196
      %v2261 = vunpack.c.l.b16 %v2197
      %v2262 = vunpack.c.l.b16 %v2198
      %v2263 = vunpack.c.l.b16 %v2199
      %v2264 = vunpack.c.l.b16 %v2200
      %v2265 = vunpack.c.l.b16 %v2201
      %v2266 = vunpack.c.l.b16 %v2202
      %v2267 = vunpack.c.l.b16 %v2203
      %v2268 = vunpack.c.l.b16 %v2204
      %v2269 = vunpack.c.l.b16 %v2205
      %v2270 = vunpack.c.l.b16 %v2206
      %v2271 = vunpack.c.l.b16 %v2207
      %v2272 = vunpack.c.l.b16 %v2208
      %v2273 = vunpack.c.l.b16 %v2209
      %v2274 = vunpack.c.l.b16 %v2210
      %v2275 = vunpack.c.l.b16 %v2211
      %v2276 = vpack.c.b16 %v2245, %v2244
      %v2277 = vpack.c.b16 %v2247, %v2246
      %v2278 = vpack.c.b16 %v2249, %v2248
      %v2279 = vpack.c.b16 %v2251, %v2250
      %v2280 = vpack.c.b16 %v2253, %v2252
      %v2281 = vpack.c.b16 %v2255, %v2254
      %v2282 = vpack.c.b16 %v2257, %v2256
      %v2283 = vpack.c.b16 %v2259, %v2258
      %v2284 = vpack.c.b16 %v2261, %v2260
      %v2285 = vpack.c.b16 %v2263, %v2262
      %v2286 = vpack.c.b16 %v2265, %v2264
      %v2287 = vpack.c.b16 %v2267, %v2266
      %v2288 = vpack.c.b16 %v2269, %v2268
      %v2289 = vpack.c.b16 %v2271, %v2270
      %v2290 = vpack.c.b16 %v2273, %v2272
      %v2291 = vpack.c.b16 %v2275, %v2274
      %2308 = vmatprep.subr.bf16.mxu0 0
      %2309 = vmatpush1.bf16.msra.mxu0 %v2276
      %2310 = vmatprep.subr.bf16.mxu0 0
      %2311 = vmatpush1.bf16.msra.mxu0 %v2277
      %2312 = vmatprep.subr.bf16.mxu0 0
      %2313 = vmatpush1.bf16.msra.mxu0 %v2278
      %2314 = vmatprep.subr.bf16.mxu0 0
      %2315 = vmatpush1.bf16.msra.mxu0 %v2279
      %2316 = vmatprep.subr.bf16.mxu0 0
      %2317 = vmatpush1.bf16.msra.mxu0 %v2280
      %2318 = vmatprep.subr.bf16.mxu0 0
      %2319 = vmatpush1.bf16.msra.mxu0 %v2281
      %2320 = vmatprep.subr.bf16.mxu0 0
      %2321 = vmatpush1.bf16.msra.mxu0 %v2282
      %2322 = vmatprep.subr.bf16.mxu0 0
      %2323 = vmatpush1.bf16.msra.mxu0 %v2283
      %2324 = vmatprep.subr.bf16.mxu0 0
      %2325 = vmatpush1.bf16.msra.mxu0 %v2284
      %2326 = vmatprep.subr.bf16.mxu0 0
      %2327 = vmatpush1.bf16.msra.mxu0 %v2285
      %2328 = vmatprep.subr.bf16.mxu0 0
      %2329 = vmatpush1.bf16.msra.mxu0 %v2286
      %2330 = vmatprep.subr.bf16.mxu0 0
      %2331 = vmatpush1.bf16.msra.mxu0 %v2287
      %2332 = vmatprep.subr.bf16.mxu0 0
      %2333 = vmatpush1.bf16.msra.mxu0 %v2288
      %2334 = vmatprep.subr.bf16.mxu0 0
      %2335 = vmatpush1.bf16.msra.mxu0 %v2289
      %2336 = vmatprep.subr.bf16.mxu0 0
      %2337 = vmatpush1.bf16.msra.mxu0 %v2290
      %2338 = vmatprep.subr.bf16.mxu0 0
      %2339 = vmatpush1.bf16.msra.mxu0 %v2291
      %2340 = vmatprep.mubr.bf16.mxu0 %v2117
      %2341 = vmatmul.mubr.bf16.gmra.mrb[0].mxu0 %v2116
      %v2342 = vpop.f32.mrb[0].mxu0
      %v2343 = vadd.f32 0.0, %v2342
      %v2344 = vpop.f32.mrb[0].mxu0
      %v2345 = vpop.f32.mrb[0].mxu0
      %v2346 = vadd.f32 0.0, %v2345
      %v2347 = vpop.f32.mrb[0].mxu0
      %2348 = vmatprep.mubr.bf16.mxu0 %v2119
      %2349 = vmatmul.mubr.bf16.gmra.mrb[0].mxu0 %v2118
      %v2350 = vpop.f32.mrb[0].mxu0
      %v2351 = vadd.f32 0.0, %v2350
      %v2352 = vpop.f32.mrb[0].mxu0
      %v2353 = vpop.f32.mrb[0].mxu0
      %v2354 = vadd.f32 0.0, %v2353
      %v2355 = vpop.f32.mrb[0].mxu0
      %2356 = vmatprep.mubr.bf16.mxu0 %v2121
      %2357 = vmatmul.mubr.bf16.gmra.mrb[0].mxu0 %v2120
      %v2358 = vpop.f32.mrb[0].mxu0
      %v2359 = vadd.f32 0.0, %v2358
      %v2360 = vpop.f32.mrb[0].mxu0
      %v2361 = vpop.f32.mrb[0].mxu0
      %v2362 = vadd.f32 0.0, %v2361
      %v2363 = vpop.f32.mrb[0].mxu0
      %2364 = vmatprep.mubr.bf16.mxu0 %v2123
      %2365 = vmatmul.mubr.bf16.gmra.mrb[0].mxu0 %v2122
      %v2366 = vpop.f32.mrb[0].mxu0
      %v2367 = vadd.f32 0.0, %v2366
      %v2368 = vpop.f32.mrb[0].mxu0
      %v2369 = vpop.f32.mrb[0].mxu0
      %v2370 = vadd.f32 0.0, %v2369
      %v2371 = vpop.f32.mrb[0].mxu0
      %2372 = vmatprep.mubr.bf16.mxu0 %v2125
      %2373 = vmatmul.mubr.bf16.gmra.mrb[0].mxu0 %v2124
      %v2374 = vpop.f32.mrb[0].mxu0
      %v2375 = vadd.f32 0.0, %v2374
      %v2376 = vpop.f32.mrb[0].mxu0
      %v2377 = vpop.f32.mrb[0].mxu0
      %v2378 = vadd.f32 0.0, %v2377
      %v2379 = vpop.f32.mrb[0].mxu0
      %2380 = vmatprep.mubr.bf16.mxu0 %v2127
      %2381 = vmatmul.mubr.bf16.gmra.mrb[0].mxu0 %v2126
      %v2382 = vpop.f32.mrb[0].mxu0
      %v2383 = vadd.f32 0.0, %v2382
      %v2384 = vpop.f32.mrb[0].mxu0
      %v2385 = vpop.f32.mrb[0].mxu0
      %v2386 = vadd.f32 0.0, %v2385
      %v2387 = vpop.f32.mrb[0].mxu0
      %2388 = vmatprep.mubr.bf16.mxu0 %v2129
      %2389 = vmatmul.mubr.bf16.gmra.mrb[0].mxu0 %v2128
      %v2390 = vpop.f32.mrb[0].mxu0
      %v2391 = vadd.f32 0.0, %v2390
      %v2392 = vpop.f32.mrb[0].mxu0
      %v2393 = vpop.f32.mrb[0].mxu0
      %v2394 = vadd.f32 0.0, %v2393
      %v2395 = vpop.f32.mrb[0].mxu0
      %2396 = vmatprep.mubr.bf16.mxu0 %v2131
      %2397 = vmatmul.mubr.bf16.gmra.mrb[0].mxu0 %v2130
      %v2398 = vpop.f32.mrb[0].mxu0
      %v2399 = vadd.f32 0.0, %v2398
      %v2400 = vpop.f32.mrb[0].mxu0
      %v2401 = vpop.f32.mrb[0].mxu0
      %v2402 = vadd.f32 0.0, %v2401
      %v2403 = vpop.f32.mrb[0].mxu0
      %2404 = vmatprep.mubr.bf16.mxu0 %v2133
      %2405 = vmatmul.mubr.bf16.gmra.mrb[0].mxu0 %v2132
      %v2406 = vpop.f32.mrb[0].mxu0
      %v2407 = vadd.f32 0.0, %v2406
      %v2408 = vpop.f32.mrb[0].mxu0
      %v2409 = vpop.f32.mrb[0].mxu0
      %v2410 = vadd.f32 0.0, %v2409
      %v2411 = vpop.f32.mrb[0].mxu0
      %2412 = vmatprep.mubr.bf16.mxu0 %v2135
      %2413 = vmatmul.mubr.bf16.gmra.mrb[0].mxu0 %v2134
      %v2414 = vpop.f32.mrb[0].mxu0
      %v2415 = vadd.f32 0.0, %v2414
      %v2416 = vpop.f32.mrb[0].mxu0
      %v2417 = vpop.f32.mrb[0].mxu0
      %v2418 = vadd.f32 0.0, %v2417
      %v2419 = vpop.f32.mrb[0].mxu0
      %2420 = vmatprep.mubr.bf16.mxu0 %v2137
      %2421 = vmatmul.mubr.bf16.gmra.mrb[0].mxu0 %v2136
      %v2422 = vpop.f32.mrb[0].mxu0
      %v2423 = vadd.f32 0.0, %v2422
      %v2424 = vpop.f32.mrb[0].mxu0
      %v2425 = vpop.f32.mrb[0].mxu0
      %v2426 = vadd.f32 0.0, %v2425
      %v2427 = vpop.f32.mrb[0].mxu0
      %2428 = vmatprep.mubr.bf16.mxu0 %v2139
      %2429 = vmatmul.mubr.bf16.gmra.mrb[0].mxu0 %v2138
      %v2430 = vpop.f32.mrb[0].mxu0
      %v2431 = vadd.f32 0.0, %v2430
      %v2432 = vpop.f32.mrb[0].mxu0
      %v2433 = vpop.f32.mrb[0].mxu0
      %v2434 = vadd.f32 0.0, %v2433
      %v2435 = vpop.f32.mrb[0].mxu0
      %2436 = vmatprep.mubr.bf16.mxu0 %v2141
      %2437 = vmatmul.mubr.bf16.gmra.mrb[0].mxu0 %v2140
      %v2438 = vpop.f32.mrb[0].mxu0
      %v2439 = vadd.f32 0.0, %v2438
      %v2440 = vpop.f32.mrb[0].mxu0
      %v2441 = vpop.f32.mrb[0].mxu0
      %v2442 = vadd.f32 0.0, %v2441
      %v2443 = vpop.f32.mrb[0].mxu0
      %2444 = vmatprep.mubr.bf16.mxu0 %v2143
      %2445 = vmatmul.mubr.bf16.gmra.mrb[0].mxu0 %v2142
      %v2446 = vpop.f32.mrb[0].mxu0
      %v2447 = vadd.f32 0.0, %v2446
      %v2448 = vpop.f32.mrb[0].mxu0
      %v2449 = vpop.f32.mrb[0].mxu0
      %v2450 = vadd.f32 0.0, %v2449
      %v2451 = vpop.f32.mrb[0].mxu0
      %2452 = vmatprep.mubr.bf16.mxu0 %v2145
      %2453 = vmatmul.mubr.bf16.gmra.mrb[0].mxu0 %v2144
      %v2454 = vpop.f32.mrb[0].mxu0
      %v2455 = vadd.f32 0.0, %v2454
      %v2456 = vpop.f32.mrb[0].mxu0
      %v2457 = vpop.f32.mrb[0].mxu0
      %v2458 = vadd.f32 0.0, %v2457
      %v2459 = vpop.f32.mrb[0].mxu0
      %2460 = vmatprep.mubr.bf16.mxu0 %v2147
      %2461 = vmatmul.mubr.bf16.gmra.mrb[0].mxu0 %v2146
      %v2462 = vpop.f32.mrb[0].mxu0
      %v2463 = vadd.f32 0.0, %v2462
      %v2464 = vpop.f32.mrb[0].mxu0
      %v2465 = vpop.f32.mrb[0].mxu0
      %v2466 = vadd.f32 0.0, %v2465
      %v2467 = vpop.f32.mrb[0].mxu0
      %2468 = vmatprep.mubr.bf16.mxu0 %v2149
      %2469 = vmatmul.mubr.bf16.gmra.mrb[0].mxu0 %v2148
      %v2470 = vpop.f32.mrb[0].mxu0
      %v2471 = vadd.f32 0.0, %v2470
      %v2472 = vpop.f32.mrb[0].mxu0
      %v2473 = vpop.f32.mrb[0].mxu0
      %v2474 = vadd.f32 0.0, %v2473
      %v2475 = vpop.f32.mrb[0].mxu0
      %2476 = vmatprep.mubr.bf16.mxu0 %v2151
      %2477 = vmatmul.mubr.bf16.gmra.mrb[0].mxu0 %v2150
      %v2478 = vpop.f32.mrb[0].mxu0
      %v2479 = vadd.f32 0.0, %v2478
      %v2480 = vpop.f32.mrb[0].mxu0
      %v2481 = vpop.f32.mrb[0].mxu0
      %v2482 = vadd.f32 0.0, %v2481
      %v2483 = vpop.f32.mrb[0].mxu0
      %2484 = vmatprep.mubr.bf16.mxu0 %v2153
      %2485 = vmatmul.mubr.bf16.gmra.mrb[0].mxu0 %v2152
      %v2486 = vpop.f32.mrb[0].mxu0
      %v2487 = vadd.f32 0.0, %v2486
      %v2488 = vpop.f32.mrb[0].mxu0
      %v2489 = vpop.f32.mrb[0].mxu0
      %v2490 = vadd.f32 0.0, %v2489
      %v2491 = vpop.f32.mrb[0].mxu0
      %2492 = vmatprep.mubr.bf16.mxu0 %v2155
      %2493 = vmatmul.mubr.bf16.gmra.mrb[0].mxu0 %v2154
      %v2494 = vpop.f32.mrb[0].mxu0
      %v2495 = vadd.f32 0.0, %v2494
      %v2496 = vpop.f32.mrb[0].mxu0
      %v2497 = vpop.f32.mrb[0].mxu0
      %v2498 = vadd.f32 0.0, %v2497
      %v2499 = vpop.f32.mrb[0].mxu0
      %2500 = vmatprep.mubr.bf16.mxu0 %v2157
      %2501 = vmatmul.mubr.bf16.gmra.mrb[0].mxu0 %v2156
      %v2502 = vpop.f32.mrb[0].mxu0
      %v2503 = vadd.f32 0.0, %v2502
      %v2504 = vpop.f32.mrb[0].mxu0
      %v2505 = vpop.f32.mrb[0].mxu0
      %v2506 = vadd.f32 0.0, %v2505
      %v2507 = vpop.f32.mrb[0].mxu0
      %2508 = vmatprep.mubr.bf16.mxu0 %v2159
      %2509 = vmatmul.mubr.bf16.gmra.mrb[0].mxu0 %v2158
      %v2510 = vpop.f32.mrb[0].mxu0
      %v2511 = vadd.f32 0.0, %v2510
      %v2512 = vpop.f32.mrb[0].mxu0
      %v2513 = vpop.f32.mrb[0].mxu0
      %v2514 = vadd.f32 0.0, %v2513
      %v2515 = vpop.f32.mrb[0].mxu0
      %2516 = vmatprep.mubr.bf16.mxu0 %v2161
      %2517 = vmatmul.mubr.bf16.gmra.mrb[0].mxu0 %v2160
      %v2518 = vpop.f32.mrb[0].mxu0
      %v2519 = vadd.f32 0.0, %v2518
      %v2520 = vpop.f32.mrb[0].mxu0
      %v2521 = vpop.f32.mrb[0].mxu0
      %v2522 = vadd.f32 0.0, %v2521
      %v2523 = vpop.f32.mrb[0].mxu0
      %2524 = vmatprep.mubr.bf16.mxu0 %v2163
      %2525 = vmatmul.mubr.bf16.gmra.mrb[0].mxu0 %v2162
      %v2526 = vpop.f32.mrb[0].mxu0
      %v2527 = vadd.f32 0.0, %v2526
      %v2528 = vpop.f32.mrb[0].mxu0
      %v2529 = vpop.f32.mrb[0].mxu0
      %v2530 = vadd.f32 0.0, %v2529
      %v2531 = vpop.f32.mrb[0].mxu0
      %2532 = vmatprep.mubr.bf16.mxu0 %v2165
      %2533 = vmatmul.mubr.bf16.gmra.mrb[0].mxu0 %v2164
      %v2534 = vpop.f32.mrb[0].mxu0
      %v2535 = vadd.f32 0.0, %v2534
      %v2536 = vpop.f32.mrb[0].mxu0
      %v2537 = vpop.f32.mrb[0].mxu0
      %v2538 = vadd.f32 0.0, %v2537
      %v2539 = vpop.f32.mrb[0].mxu0
      %2540 = vmatprep.mubr.bf16.mxu0 %v2167
      %2541 = vmatmul.mubr.bf16.gmra.mrb[0].mxu0 %v2166
      %v2542 = vpop.f32.mrb[0].mxu0
      %v2543 = vadd.f32 0.0, %v2542
      %v2544 = vpop.f32.mrb[0].mxu0
      %v2545 = vpop.f32.mrb[0].mxu0
      %v2546 = vadd.f32 0.0, %v2545
      %v2547 = vpop.f32.mrb[0].mxu0
      %2548 = vmatprep.mubr.bf16.mxu0 %v2169
      %2549 = vmatmul.mubr.bf16.gmra.mrb[0].mxu0 %v2168
      %v2550 = vpop.f32.mrb[0].mxu0
      %v2551 = vadd.f32 0.0, %v2550
      %v2552 = vpop.f32.mrb[0].mxu0
      %v2553 = vpop.f32.mrb[0].mxu0
      %v2554 = vadd.f32 0.0, %v2553
      %v2555 = vpop.f32.mrb[0].mxu0
      %2556 = vmatprep.mubr.bf16.mxu0 %v2171
      %2557 = vmatmul.mubr.bf16.gmra.mrb[0].mxu0 %v2170
      %v2558 = vpop.f32.mrb[0].mxu0
      %v2559 = vadd.f32 0.0, %v2558
      %v2560 = vpop.f32.mrb[0].mxu0
      %v2561 = vpop.f32.mrb[0].mxu0
      %v2562 = vadd.f32 0.0, %v2561
      %v2563 = vpop.f32.mrb[0].mxu0
      %2564 = vmatprep.mubr.bf16.mxu0 %v2173
      %2565 = vmatmul.mubr.bf16.gmra.mrb[0].mxu0 %v2172
      %v2566 = vpop.f32.mrb[0].mxu0
      %v2567 = vadd.f32 0.0, %v2566
      %v2568 = vpop.f32.mrb[0].mxu0
      %v2569 = vpop.f32.mrb[0].mxu0
      %v2570 = vadd.f32 0.0, %v2569
      %v2571 = vpop.f32.mrb[0].mxu0
      %2572 = vmatprep.mubr.bf16.mxu0 %v2175
      %2573 = vmatmul.mubr.bf16.gmra.mrb[0].mxu0 %v2174
      %v2574 = vpop.f32.mrb[0].mxu0
      %v2575 = vadd.f32 0.0, %v2574
      %v2576 = vpop.f32.mrb[0].mxu0
      %v2577 = vpop.f32.mrb[0].mxu0
      %v2578 = vadd.f32 0.0, %v2577
      %v2579 = vpop.f32.mrb[0].mxu0
      %2580 = vmatprep.mubr.bf16.mxu0 %v2177
      %2581 = vmatmul.mubr.bf16.gmra.mrb[0].mxu0 %v2176
      %v2582 = vpop.f32.mrb[0].mxu0
      %v2583 = vadd.f32 0.0, %v2582
      %v2584 = vpop.f32.mrb[0].mxu0
      %v2585 = vpop.f32.mrb[0].mxu0
      %v2586 = vadd.f32 0.0, %v2585
      %v2587 = vpop.f32.mrb[0].mxu0
      %2588 = vmatprep.mubr.bf16.mxu0 %v2179
      %2589 = vmatmul.mubr.bf16.gmra.mrb[0].mxu0 %v2178
      %v2590 = vpop.f32.mrb[0].mxu0
      %v2591 = vadd.f32 0.0, %v2590
      %v2592 = vpop.f32.mrb[0].mxu0
      %v2593 = vpop.f32.mrb[0].mxu0
      %v2594 = vadd.f32 0.0, %v2593
      %v2595 = vpop.f32.mrb[0].mxu0
      %2596 = vdwg.mxu0
      %vm2597 = vcmask 261120
      %2598 = vst.msk [vmem:[%s233] sm:$0xff] %vm2597, %v2343
      %2599 = vst.msk [vmem:[%s233 + $0x8] sm:$0xff] %vm2597, %v2346
      %2600 = vst.msk [vmem:[%s233 + $0x10] sm:$0xff] %vm2597, %v2351
      %2601 = vst.msk [vmem:[%s233 + $0x18] sm:$0xff] %vm2597, %v2354
      %2602 = vst.msk [vmem:[%s233 + $0x20] sm:$0xff] %vm2597, %v2359
      %2603 = vst.msk [vmem:[%s233 + $0x28] sm:$0xff] %vm2597, %v2362
      %2604 = vst.msk [vmem:[%s233 + $0x30] sm:$0xff] %vm2597, %v2367
      %2605 = vst.msk [vmem:[%s233 + $0x38] sm:$0xff] %vm2597, %v2370
      %2606 = vst.msk [vmem:[%s233 + $0x40] sm:$0xff] %vm2597, %v2375
      %2607 = vst.msk [vmem:[%s233 + $0x48] sm:$0xff] %vm2597, %v2378
      %2608 = vst.msk [vmem:[%s233 + $0x50] sm:$0xff] %vm2597, %v2383
      %2609 = vst.msk [vmem:[%s233 + $0x58] sm:$0xff] %vm2597, %v2386
      %2610 = vst.msk [vmem:[%s233 + $0x60] sm:$0xff] %vm2597, %v2391
      %2611 = vst.msk [vmem:[%s233 + $0x68] sm:$0xff] %vm2597, %v2394
      %2612 = vst.msk [vmem:[%s233 + $0x70] sm:$0xff] %vm2597, %v2399
      %2613 = vst.msk [vmem:[%s233 + $0x78] sm:$0xff] %vm2597, %v2402
      %2614 = vst.msk [vmem:[%s233 + $0x80] sm:$0xff] %vm2597, %v2407
      %2615 = vst.msk [vmem:[%s233 + $0x88] sm:$0xff] %vm2597, %v2410
      %2616 = vst.msk [vmem:[%s233 + $0x90] sm:$0xff] %vm2597, %v2415
      %2617 = vst.msk [vmem:[%s233 + $0x98] sm:$0xff] %vm2597, %v2418
      %2618 = vst.msk [vmem:[%s233 + $0xa0] sm:$0xff] %vm2597, %v2423
      %2619 = vst.msk [vmem:[%s233 + $0xa8] sm:$0xff] %vm2597, %v2426
      %2620 = vst.msk [vmem:[%s233 + $0xb0] sm:$0xff] %vm2597, %v2431
      %2621 = vst.msk [vmem:[%s233 + $0xb8] sm:$0xff] %vm2597, %v2434
      %2622 = vst.msk [vmem:[%s233 + $0xc0] sm:$0xff] %vm2597, %v2439
      %2623 = vst.msk [vmem:[%s233 + $0xc8] sm:$0xff] %vm2597, %v2442
      %2624 = vst.msk [vmem:[%s233 + $0xd0] sm:$0xff] %vm2597, %v2447
      %2625 = vst.msk [vmem:[%s233 + $0xd8] sm:$0xff] %vm2597, %v2450
      %2626 = vst.msk [vmem:[%s233 + $0xe0] sm:$0xff] %vm2597, %v2455
      %2627 = vst.msk [vmem:[%s233 + $0xe8] sm:$0xff] %vm2597, %v2458
      %2628 = vst.msk [vmem:[%s233 + $0xf0] sm:$0xff] %vm2597, %v2463
      %2629 = vst.msk [vmem:[%s233 + $0xf8] sm:$0xff] %vm2597, %v2466
      %2630 = vst.msk [vmem:[%s233 + $0x100] sm:$0xff] %vm2597, %v2471
      %2631 = vst.msk [vmem:[%s233 + $0x108] sm:$0xff] %vm2597, %v2474
      %2632 = vst.msk [vmem:[%s233 + $0x110] sm:$0xff] %vm2597, %v2479
      %2633 = vst.msk [vmem:[%s233 + $0x118] sm:$0xff] %vm2597, %v2482
      %2634 = vst.msk [vmem:[%s233 + $0x120] sm:$0xff] %vm2597, %v2487
      %2635 = vst.msk [vmem:[%s233 + $0x128] sm:$0xff] %vm2597, %v2490
      %2636 = vst.msk [vmem:[%s233 + $0x130] sm:$0xff] %vm2597, %v2495
      %2637 = vst.msk [vmem:[%s233 + $0x138] sm:$0xff] %vm2597, %v2498
      %2638 = vst.msk [vmem:[%s233 + $0x140] sm:$0xff] %vm2597, %v2503
      %2639 = vst.msk [vmem:[%s233 + $0x148] sm:$0xff] %vm2597, %v2506
      %2640 = vst.msk [vmem:[%s233 + $0x150] sm:$0xff] %vm2597, %v2511
      %2641 = vst.msk [vmem:[%s233 + $0x158] sm:$0xff] %vm2597, %v2514
      %2642 = vst.msk [vmem:[%s233 + $0x160] sm:$0xff] %vm2597, %v2519
      %2643 = vst.msk [vmem:[%s233 + $0x168] sm:$0xff] %vm2597, %v2522
      %2644 = vst.msk [vmem:[%s233 + $0x170] sm:$0xff] %vm2597, %v2527
      %2645 = vst.msk [vmem:[%s233 + $0x178] sm:$0xff] %vm2597, %v2530
      %2646 = vst.msk [vmem:[%s233 + $0x180] sm:$0xff] %vm2597, %v2535
      %2647 = vst.msk [vmem:[%s233 + $0x188] sm:$0xff] %vm2597, %v2538
      %2648 = vst.msk [vmem:[%s233 + $0x190] sm:$0xff] %vm2597, %v2543
      %2649 = vst.msk [vmem:[%s233 + $0x198] sm:$0xff] %vm2597, %v2546
      %2650 = vst.msk [vmem:[%s233 + $0x1a0] sm:$0xff] %vm2597, %v2551
      %2651 = vst.msk [vmem:[%s233 + $0x1a8] sm:$0xff] %vm2597, %v2554
      %2652 = vst.msk [vmem:[%s233 + $0x1b0] sm:$0xff] %vm2597, %v2559
      %2653 = vst.msk [vmem:[%s233 + $0x1b8] sm:$0xff] %vm2597, %v2562
      %2654 = vst.msk [vmem:[%s233 + $0x1c0] sm:$0xff] %vm2597, %v2567
      %2655 = vst.msk [vmem:[%s233 + $0x1c8] sm:$0xff] %vm2597, %v2570
      %2656 = vst.msk [vmem:[%s233 + $0x1d0] sm:$0xff] %vm2597, %v2575
      %2657 = vst.msk [vmem:[%s233 + $0x1d8] sm:$0xff] %vm2597, %v2578
      %2658 = vst.msk [vmem:[%s233 + $0x1e0] sm:$0xff] %vm2597, %v2583
      %2659 = vst.msk [vmem:[%s233 + $0x1e8] sm:$0xff] %vm2597, %v2586
      %2660 = vst.msk [vmem:[%s233 + $0x1f0] sm:$0xff] %vm2597, %v2591
      %2661 = vst.msk [vmem:[%s233 + $0x1f8] sm:$0xff] %vm2597, %v2594
      %s2662 = smul.u32 64, %s22
      %p2663 = scmp.lt.s32.totalorder %s2662, 127
      %s2664 = scalar_select %p2663, %s2662, 127
      %s2665 = smul.addr %s2664, 8
      %s2666 = scalar_lea.vmem %s5, %s2665
      // Predicated region
      $region37: #{tpu_custom_call.1} parent=35 // pred_check
        %p2667 = pneg %p136
      $region38: #{tpu_custom_call.1} parent=35 // pred_check_branch
        %2669 = sbr.rel (%p2667) target = $region40
      $region39: #{tpu_custom_call.1} parent=35 // pred_region
        %s2670 = smul.u32 64, %s22
      $region40: #{tpu_custom_call.1} parent=35 // pred_fallthru
        _
    $region36: #{tpu_custom_call.1} parent=5 // pred_fallthru
      _
    %p2671 = scmp.le.s32.totalorder 2, %s17
    // Predicated region
    $region41: #{tpu_custom_call.1} parent=5 // pred_check
      %p2672 = pneg %p2671
    $region42: #{tpu_custom_call.1} parent=5 // pred_check_branch
      %2674 = sbr.rel (%p2672) target = $region44
    $region43: #{tpu_custom_call.1} parent=5 // pred_region
      %s2675 = ssub.s32 %s17, 2
      // Predicated region
      $region45: #{tpu_custom_call.1} parent=43 // pred_check
        %p2676 = pneg %p142
      $region46: #{tpu_custom_call.1} parent=43 // pred_check_branch
        %2678 = sbr.rel (%p2676) target = $region48
      $region47: #{tpu_custom_call.1} parent=43 // pred_region
        %s2679 = smul.u32 64, %s23
        %p2680 = scmp.lt.s32.totalorder %s2679, 127
        %s2681 = scalar_select %p2680, %s2679, 127
        %s2682 = smul.addr %s2681, 8
        %s2683 = scalar_lea.vmem %s5, %s2682
      $region48: #{tpu_custom_call.1} parent=43 // pred_fallthru
        _
    $region44: #{tpu_custom_call.1} parent=5 // pred_fallthru
      _
  $region6: #{tpu_custom_call.1} parent=0 // loop_footer
    %s21 = sadd.s32 1, %s17
  $region7: #{tpu_custom_call.1} parent=0 // loop_footer_branch
    %16 = sbr.rel target = $region3
  $region8: #{tpu_custom_call.1} parent=0 // loop_exit
    _

</llo_original>
